<compile_context>
chip_gen: v5e
topology: v5e:2x2
jax: 0.10.0
libtpu: 0.0.40
codegen_flags: <defaults>
</compile_context>

<pallas_src>
import functools
import math

import jax
import jax.numpy as jnp
from jax.experimental import pallas as pl
from jax.experimental.pallas import tpu as pltpu


# ----------------------------------------------------------------------------
# Model configuration (synthetic "AutoModel" backbone)
# ----------------------------------------------------------------------------
VOCAB = 50
MAX_POS = 16
HIDDEN = 32
NUM_HEADS = 2
HEAD_DIM = HIDDEN // NUM_HEADS
INTERMEDIATE = 64
NUM_LAYERS = 2
NUM_LABELS = 2
PREFIX_LENGTH = 4

# ---- bf16 weight slab layout: one slot per matmul weight, zero-padded ------
W_PER_LAYER = 4                                  # [w_qkv, w_o, w_ffn1, w_ffn2]
W_EMB_SLOT = NUM_LAYERS * W_PER_LAYER            # word-embedding table slot
W_SLOTS = W_EMB_SLOT + 1
W_ROWS = max(HIDDEN, INTERMEDIATE, VOCAB)        # 64 (>= VOCAB=50)
W_COLS = max(3 * HIDDEN, INTERMEDIATE, HIDDEN)   # 96

# ---- f32 per-layer vector slab rows (biases + LN params), lane-padded ------
(VEC_BQKV, VEC_BO, VEC_LN1G, VEC_LN1B,
 VEC_B1, VEC_B2, VEC_LN2G, VEC_LN2B) = range(8)
VEC_ROWS = 8

# ---- f32 misc slab rows (pos-emb, emb-LN, classifier) -----------------------
MISC_EMB_G = MAX_POS
MISC_EMB_B = MAX_POS + 1
MISC_CLS_B = MAX_POS + 2
MISC_CLS_W0 = MAX_POS + 3                        # NUM_LABELS rows = cls_w^T
MISC_ROWS = MAX_POS + 3 + NUM_LABELS


def _full_spec(a):
    """Whole-array-as-one-block BlockSpec for grid=(1,)."""
    zeros = (0,) * a.ndim
    return pl.BlockSpec(a.shape, lambda i, _z=zeros: _z)


# ----------------------------------------------------------------------------
# Fused embeddings + encoder + mean-pool + classifier kernel
# ----------------------------------------------------------------------------
def _encoder_kernel(ids_ref, mask_ref, misc_ref, vec_ref, w_ref, o_ref):
    f32, bf16 = jnp.float32, jnp.bfloat16
    BS = ids_ref.shape[0]
    B, _, S = mask_ref.shape
    scale = 1.0 / math.sqrt(HEAD_DIM)

    def layernorm(v, g, b, eps=1e-12):
        mu = jnp.mean(v, axis=-1, keepdims=True)
        var = jnp.mean((v - mu) * (v - mu), axis=-1, keepdims=True)
        return (v - mu) * jax.lax.rsqrt(var + eps) * g + b

    def mm(a_bf16, w_bf16):  # bf16 MXU matmul, f32 accumulation
        return jnp.dot(a_bf16, w_bf16, preferred_element_type=f32)

    # ---- embedding gather as one-hot matmul on the MXU (fused in-kernel) ----
    wemb = w_ref[W_EMB_SLOT, :VOCAB, :HIDDEN]                    # (V, H) bf16
    ids = ids_ref[...]                                           # (B*S, 1) i32
    iota = jax.lax.broadcasted_iota(jnp.int32, (BS, VOCAB), 1)
    onehot = (iota == ids).astype(bf16)                          # (B*S, V)
    x = mm(onehot, wemb)                                         # (B*S, H) f32
    pos = misc_ref[0:S, :]                                       # (S, H)
    x = x + jnp.concatenate([pos] * B, axis=0)                   # position add
    x = layernorm(x, misc_ref[MISC_EMB_G:MISC_EMB_G + 1, :],
                  misc_ref[MISC_EMB_B:MISC_EMB_B + 1, :])

    # additive attention bias (0 attend / -1e9 mask), computed once: (B, 1, S)
    bias3 = (1.0 - mask_ref[...].astype(f32)) * -1e9

    # Python-unrolled layer loop over stacked weights (all resident in VMEM).
    for l in range(NUM_LAYERS):
        base = l * W_PER_LAYER
        w_qkv = w_ref[base + 0, :HIDDEN, :]                      # (H, 3H) bf16
        w_o = w_ref[base + 1, :HIDDEN, :HIDDEN]                  # (H, H)
        w_f1 = w_ref[base + 2, :HIDDEN, :INTERMEDIATE]           # (H, I)
        w_f2 = w_ref[base + 3, :INTERMEDIATE, :HIDDEN]           # (I, H)

        # ---- fused QKV projection: single (B*S, 3H) matmul, bf16 once ----
        qkv = mm(x.astype(bf16), w_qkv) + vec_ref[l, VEC_BQKV:VEC_BQKV + 1, :]
        qkv = qkv.reshape(B, S, 3 * HIDDEN).astype(bf16)         # (B, S, 3H)

        # ---- attention: batched over B, per-head einsums (NUM_HEADS = 2) ----
        ctx_heads = []
        for h in range(NUM_HEADS):
            c0 = h * HEAD_DIM
            q_h = qkv[:, :, c0:c0 + HEAD_DIM]                    # (B, S, Dh)
            k_h = qkv[:, :, HIDDEN + c0:HIDDEN + c0 + HEAD_DIM]
            v_h = qkv[:, :, 2 * HIDDEN + c0:2 * HIDDEN + c0 + HEAD_DIM]
            s_h = jnp.einsum('bqd,bkd->bqk', q_h, k_h,
                             preferred_element_type=f32) * scale + bias3
            m = jnp.max(s_h, axis=-1, keepdims=True)
            p = jnp.exp(s_h - m)                                 # f32 (EUP)
            probs = p * pl.reciprocal(jnp.sum(p, axis=-1, keepdims=True),
                                      approx=True)
            ctx_heads.append(jnp.einsum('bqk,bkd->bqd', probs.astype(bf16),
                                        v_h, preferred_element_type=f32))
        # one head re-concat + ONE output projection matmul
        ctx = jnp.concatenate(ctx_heads, axis=-1).reshape(BS, HIDDEN)
        attn = mm(ctx.astype(bf16), w_o) + vec_ref[l, VEC_BO:VEC_BO + 1, :HIDDEN]

        # ---- residual + LayerNorm (fused) ----
        x = layernorm(x + attn,
                      vec_ref[l, VEC_LN1G:VEC_LN1G + 1, :HIDDEN],
                      vec_ref[l, VEC_LN1B:VEC_LN1B + 1, :HIDDEN])

        # ---- FFN (matmul + GELU + matmul) + residual + LayerNorm ----
        h1 = mm(x.astype(bf16), w_f1) + vec_ref[l, VEC_B1:VEC_B1 + 1, :INTERMEDIATE]
        # TODO(synk): HF BERT default is exact (erf) GELU; tanh approx used here.
        h1 = jax.nn.gelu(h1, approximate=True)
        ffn = mm(h1.astype(bf16), w_f2) + vec_ref[l, VEC_B2:VEC_B2 + 1, :HIDDEN]
        x = layernorm(x + ffn,
                      vec_ref[l, VEC_LN2G:VEC_LN2G + 1, :HIDDEN],
                      vec_ref[l, VEC_LN2B:VEC_LN2B + 1, :HIDDEN])

    # ---- mean over sequence (torch.mean(dim=1)) + classifier, fused ----
    mean = jnp.mean(x.reshape(B, S, HIDDEN), axis=1)             # (B, H) f32
    cls_w = misc_ref[MISC_CLS_W0:MISC_CLS_W0 + NUM_LABELS, :]    # (NL, H)
    logits = jax.lax.dot_general(mean, cls_w, (((1,), (1,)), ((), ())),
                                 preferred_element_type=f32)
    logits = logits + misc_ref[MISC_CLS_B:MISC_CLS_B + 1, :NUM_LABELS]
    o_ref[...] = logits.astype(o_ref.dtype)


def fused_encoder_classifier(packed, ids, mask3):
    """One pallas_call: embeddings -> NUM_LAYERS layers -> mean -> classifier."""
    B = mask3.shape[0]
    inputs = (ids, mask3, packed["misc"], packed["vec_slab"], packed["w_slab"])
    return pl.pallas_call(
        _encoder_kernel,
        grid=(1,),
        in_specs=[_full_spec(a) for a in inputs],
        out_specs=pl.BlockSpec((B, NUM_LABELS), lambda i: (0, 0)),
        out_shape=jax.ShapeDtypeStruct((B, NUM_LABELS), jnp.float32),
        compiler_params=pltpu.CompilerParams(
            dimension_semantics=("arbitrary",)),
    )(*inputs)


# ----------------------------------------------------------------------------
# Parameters and slab packing (weights pre-cast to bf16)
# ----------------------------------------------------------------------------
def init_params(key):
    ks = iter(jax.random.split(key, 32))
    n = lambda shape, s=0.02: s * jax.random.normal(next(ks), shape, jnp.float32)
    L = NUM_LAYERS
    return {
        "word_emb": n((VOCAB, HIDDEN)),
        "pos_emb": n((MAX_POS, HIDDEN)),
        "emb_ln_g": jnp.ones((HIDDEN,), jnp.float32),
        "emb_ln_b": jnp.zeros((HIDDEN,), jnp.float32),
        "w_qkv": n((L, HIDDEN, 3 * HIDDEN)),       # columns = [q | k | v]
        "b_qkv": jnp.zeros((L, 3 * HIDDEN), jnp.float32),
        "w_o": n((L, HIDDEN, HIDDEN)),
        "b_o": jnp.zeros((L, HIDDEN), jnp.float32),
        "ln1_g": jnp.ones((L, HIDDEN), jnp.float32),
        "ln1_b": jnp.zeros((L, HIDDEN), jnp.float32),
        "w1": n((L, HIDDEN, INTERMEDIATE)),
        "b1": jnp.zeros((L, INTERMEDIATE), jnp.float32),
        "w2": n((L, INTERMEDIATE, HIDDEN)),
        "b2": jnp.zeros((L, HIDDEN), jnp.float32),
        "ln2_g": jnp.ones((L, HIDDEN), jnp.float32),
        "ln2_b": jnp.zeros((L, HIDDEN), jnp.float32),
        # module-level parameters from __init__ (prefix unused in 'full'/'head')
        "prefix": jax.random.normal(next(ks), (PREFIX_LENGTH, HIDDEN), jnp.float32),
        "cls_w": n((HIDDEN, NUM_LABELS)),
        "cls_b": jnp.zeros((NUM_LABELS,), jnp.float32),
    }


def pack_params(p):
    """Pack raw params into 3 slabs: bf16 matmul weights, f32 per-layer vectors, f32 misc."""
    bf16 = jnp.bfloat16
    L = NUM_LAYERS
    # bf16 weight slab: all slices start at (row 0, lane 0) -> no offset slicing.
    w = jnp.zeros((W_SLOTS, W_ROWS, W_COLS), bf16)
    for l in range(L):
        b = l * W_PER_LAYER
        w = w.at[b + 0, :HIDDEN, :3 * HIDDEN].set(p["w_qkv"][l].astype(bf16))
        w = w.at[b + 1, :HIDDEN, :HIDDEN].set(p["w_o"][l].astype(bf16))
        w = w.at[b + 2, :HIDDEN, :INTERMEDIATE].set(p["w1"][l].astype(bf16))
        w = w.at[b + 3, :INTERMEDIATE, :HIDDEN].set(p["w2"][l].astype(bf16))
    w = w.at[W_EMB_SLOT, :VOCAB, :HIDDEN].set(p["word_emb"].astype(bf16))

    # f32 per-layer vector slab (biases + LN params)
    vec = jnp.zeros((L, VEC_ROWS, W_COLS), jnp.float32)
    for l in range(L):
        vec = vec.at[l, VEC_BQKV, :3 * HIDDEN].set(p["b_qkv"][l])
        vec = vec.at[l, VEC_BO, :HIDDEN].set(p["b_o"][l])
        vec = vec.at[l, VEC_LN1G, :HIDDEN].set(p["ln1_g"][l])
        vec = vec.at[l, VEC_LN1B, :HIDDEN].set(p["ln1_b"][l])
        vec = vec.at[l, VEC_B1, :INTERMEDIATE].set(p["b1"][l])
        vec = vec.at[l, VEC_B2, :HIDDEN].set(p["b2"][l])
        vec = vec.at[l, VEC_LN2G, :HIDDEN].set(p["ln2_g"][l])
        vec = vec.at[l, VEC_LN2B, :HIDDEN].set(p["ln2_b"][l])

    # f32 misc slab: pos-emb rows, emb-LN gamma/beta, cls bias, cls weight^T
    misc = jnp.zeros((MISC_ROWS, HIDDEN), jnp.float32)
    misc = misc.at[:MAX_POS, :].set(p["pos_emb"])
    misc = misc.at[MISC_EMB_G, :].set(p["emb_ln_g"])
    misc = misc.at[MISC_EMB_B, :].set(p["emb_ln_b"])
    misc = misc.at[MISC_CLS_B, :NUM_LABELS].set(p["cls_b"])
    misc = misc.at[MISC_CLS_W0:MISC_CLS_W0 + NUM_LABELS, :].set(p["cls_w"].T)
    return {"w_slab": w, "vec_slab": vec, "misc": misc}


# ----------------------------------------------------------------------------
# Module forward (CustomModelforSequenceClassification.forward)
# ----------------------------------------------------------------------------
@functools.partial(jax.jit, static_argnames=("mode",))
def model_forward(packed, input_ids, attention_mask, mode="full"):
    if mode in ("full", "head"):
        B, S = input_ids.shape
        ids = input_ids.reshape(B * S, 1).astype(jnp.int32)
        mask3 = attention_mask.reshape(B, 1, S).astype(jnp.float32)
        # 'head' mode: forward values identical to 'full' (torch.no_grad only
        # affects gradient flow, which this forward-pass kernel does not model).
        logits = fused_encoder_classifier(packed, ids, mask3)
    else:
        # TODO(synk): 'prefix' branch depends on the pretrained backbone's exact
        # embeddings()/inputs_embeds recomposition (HF-internal); not synthesized here.
        raise NotImplementedError("prefix mode")
    return {"logits": logits}


# ----------------------------------------------------------------------------
if __name__ == "__main__":
    key = jax.random.PRNGKey(0)
    pk, ik = jax.random.split(key)
    raw = init_params(pk)
    packed = pack_params(raw)

    B, S = 2, 8
    input_ids = jax.random.randint(ik, (B, S), 0, VOCAB, dtype=jnp.int32)
    attention_mask = jnp.array(
        [[1, 1, 1, 1, 1, 1, 1, 1],
         [1, 1, 1, 1, 1, 1, 0, 0]], dtype=jnp.int32)

    out = model_forward(packed, input_ids, attention_mask, mode="full")
    logits = jax.block_until_ready(out["logits"])
    assert logits.shape == (B, NUM_LABELS) and logits.dtype == jnp.float32
    assert bool(jnp.all(jnp.isfinite(logits)))
    print("KERNEL_OK")
</pallas_src>

<mosaic_0001>
module attributes {stable_mosaic.version = 11 : i64} {
  func.func @_encoder_kernel(%arg0: i32, %arg1: memref<16x1xi32, #tpu.memory_space<vmem>>, %arg2: memref<2x1x8xf32, #tpu.memory_space<vmem>>, %arg3: memref<21x32xf32, #tpu.memory_space<vmem>>, %arg4: memref<2x8x96xf32, #tpu.memory_space<vmem>>, %arg5: memref<9x64x96xbf16, #tpu.memory_space<vmem>>, %arg6: memref<2x2xf32, #tpu.memory_space<vmem>>) attributes {dimension_semantics = [#tpu.dimension_semantics<arbitrary>], iteration_bounds = array<i64: 1>, scalar_prefetch = 0 : i64, scratch_operands = 0 : i64, tpu.core_type = #tpu.core_type<tc>, window_params = [{pipeline_mode = #tpu.pipeline_mode<synchronous>, transform_indices = @transform_0, window_bounds = array<i64: 16, 1>}, {pipeline_mode = #tpu.pipeline_mode<synchronous>, transform_indices = @transform_1, window_bounds = array<i64: 2, 1, 8>}, {pipeline_mode = #tpu.pipeline_mode<synchronous>, transform_indices = @transform_2, window_bounds = array<i64: 21, 32>}, {pipeline_mode = #tpu.pipeline_mode<synchronous>, transform_indices = @transform_3, window_bounds = array<i64: 2, 8, 96>}, {pipeline_mode = #tpu.pipeline_mode<synchronous>, transform_indices = @transform_4, window_bounds = array<i64: 9, 64, 96>}, {pipeline_mode = #tpu.pipeline_mode<synchronous>, transform_indices = @transform_5, window_bounds = array<i64: 2, 2>}]} {
    %c8 = arith.constant 8 : index
    %c0 = arith.constant 0 : index
    %c0_0 = arith.constant 0 : index
    %0 = vector.load %arg5[%c8, %c0, %c0_0] : memref<9x64x96xbf16, #tpu.memory_space<vmem>>, vector<1x50x32xbf16>
    %1 = vector.shape_cast %0 : vector<1x50x32xbf16> to vector<50x32xbf16>
    %c0_1 = arith.constant 0 : index
    %c0_2 = arith.constant 0 : index
    %2 = vector.load %arg1[%c0_1, %c0_2] : memref<16x1xi32, #tpu.memory_space<vmem>>, vector<16x1xi32>
    %3 = tpu.iota {dimensions = array<i32: 1>} : vector<16x50xi32>
    %4 = vector.broadcast %2 : vector<16x1xi32> to vector<16x50xi32>
    %5 = arith.cmpi eq, %3, %4 : vector<16x50xi32>
    %6 = arith.extui %5 : vector<16x50xi1> to vector<16x50xi32>
    %7 = arith.sitofp %6 : vector<16x50xi32> to vector<16x50xf32>
    %8 = arith.truncf %7 : vector<16x50xf32> to vector<16x50xbf16>
    %cst = arith.constant dense<0.000000e+00> : vector<16x32xf32>
    %9 = tpu.matmul %8, %1, %cst {dimension_numbers = #tpu.dot_dimension_numbers<[1], [0], [0], [1], [0, 0, 1, 1], [], []>} : vector<16x50xbf16>, vector<50x32xbf16>, vector<16x32xf32> -> vector<16x32xf32>
    %c0_3 = arith.constant 0 : index
    %c0_4 = arith.constant 0 : index
    %10 = vector.load %arg3[%c0_3, %c0_4] : memref<21x32xf32, #tpu.memory_space<vmem>>, vector<8x32xf32>
    %11 = tpu.concatenate %10, %10 in 0 : vector<8x32xf32>, vector<8x32xf32> -> vector<16x32xf32>
    %12 = arith.addf %9, %11 : vector<16x32xf32>
    %c16 = arith.constant 16 : index
    %c0_5 = arith.constant 0 : index
    %13 = vector.load %arg3[%c16, %c0_5] : memref<21x32xf32, #tpu.memory_space<vmem>>, vector<1x32xf32>
    %c17 = arith.constant 17 : index
    %c0_6 = arith.constant 0 : index
    %14 = vector.load %arg3[%c17, %c0_6] : memref<21x32xf32, #tpu.memory_space<vmem>>, vector<1x32xf32>
    %cst_7 = arith.constant dense<0.000000e+00> : vector<16xf32>
    %15 = vector.multi_reduction <add>, %12, %cst_7 [1] : vector<16x32xf32> to vector<16xf32>
    %16 = vector.shape_cast %15 : vector<16xf32> to vector<16x1xf32>
    %cst_8 = arith.constant 3.200000e+01 : f32
    %17 = vector.broadcast %cst_8 : f32 to vector<16x1xf32>
    %18 = arith.divf %16, %17 : vector<16x1xf32>
    %19 = vector.broadcast %18 : vector<16x1xf32> to vector<16x32xf32>
    %20 = arith.subf %12, %19 : vector<16x32xf32>
    %21 = vector.broadcast %18 : vector<16x1xf32> to vector<16x32xf32>
    %22 = arith.subf %12, %21 : vector<16x32xf32>
    %23 = arith.mulf %20, %22 : vector<16x32xf32>
    %cst_9 = arith.constant dense<0.000000e+00> : vector<16xf32>
    %24 = vector.multi_reduction <add>, %23, %cst_9 [1] : vector<16x32xf32> to vector<16xf32>
    %25 = vector.shape_cast %24 : vector<16xf32> to vector<16x1xf32>
    %cst_10 = arith.constant 3.200000e+01 : f32
    %26 = vector.broadcast %cst_10 : f32 to vector<16x1xf32>
    %27 = arith.divf %25, %26 : vector<16x1xf32>
    %28 = vector.broadcast %18 : vector<16x1xf32> to vector<16x32xf32>
    %29 = arith.subf %12, %28 : vector<16x32xf32>
    %cst_11 = arith.constant 9.99999996E-13 : f32
    %30 = vector.broadcast %cst_11 : f32 to vector<16x1xf32>
    %31 = arith.addf %27, %30 : vector<16x1xf32>
    %32 = math.rsqrt %31 : vector<16x1xf32>
    %33 = vector.broadcast %32 : vector<16x1xf32> to vector<16x32xf32>
    %34 = arith.mulf %29, %33 : vector<16x32xf32>
    %35 = vector.broadcast %13 : vector<1x32xf32> to vector<16x32xf32>
    %36 = arith.mulf %34, %35 : vector<16x32xf32>
    %37 = vector.broadcast %14 : vector<1x32xf32> to vector<16x32xf32>
    %38 = arith.addf %36, %37 : vector<16x32xf32>
    %c0_12 = arith.constant 0 : index
    %c0_13 = arith.constant 0 : index
    %c0_14 = arith.constant 0 : index
    %39 = vector.load %arg2[%c0_12, %c0_13, %c0_14] : memref<2x1x8xf32, #tpu.memory_space<vmem>>, vector<2x1x8xf32>
    %cst_15 = arith.constant 1.000000e+00 : f32
    %40 = vector.broadcast %cst_15 : f32 to vector<2x1x8xf32>
    %41 = arith.subf %40, %39 : vector<2x1x8xf32>
    %cst_16 = arith.constant -1.000000e+09 : f32
    %42 = vector.broadcast %cst_16 : f32 to vector<2x1x8xf32>
    %43 = arith.mulf %41, %42 : vector<2x1x8xf32>
    %c0_17 = arith.constant 0 : index
    %c0_18 = arith.constant 0 : index
    %c0_19 = arith.constant 0 : index
    %44 = vector.load %arg5[%c0_17, %c0_18, %c0_19] : memref<9x64x96xbf16, #tpu.memory_space<vmem>>, vector<1x32x96xbf16>
    %45 = vector.shape_cast %44 : vector<1x32x96xbf16> to vector<32x96xbf16>
    %c1 = arith.constant 1 : index
    %c0_20 = arith.constant 0 : index
    %c0_21 = arith.constant 0 : index
    %46 = vector.load %arg5[%c1, %c0_20, %c0_21] : memref<9x64x96xbf16, #tpu.memory_space<vmem>>, vector<1x32x32xbf16>
    %47 = vector.shape_cast %46 : vector<1x32x32xbf16> to vector<32x32xbf16>
    %c2 = arith.constant 2 : index
    %c0_22 = arith.constant 0 : index
    %c0_23 = arith.constant 0 : index
    %48 = vector.load %arg5[%c2, %c0_22, %c0_23] : memref<9x64x96xbf16, #tpu.memory_space<vmem>>, vector<1x32x64xbf16>
    %49 = vector.shape_cast %48 : vector<1x32x64xbf16> to vector<32x64xbf16>
    %c3 = arith.constant 3 : index
    %c0_24 = arith.constant 0 : index
    %c0_25 = arith.constant 0 : index
    %50 = vector.load %arg5[%c3, %c0_24, %c0_25] : memref<9x64x96xbf16, #tpu.memory_space<vmem>>, vector<1x64x32xbf16>
    %51 = vector.shape_cast %50 : vector<1x64x32xbf16> to vector<64x32xbf16>
    %52 = arith.truncf %38 : vector<16x32xf32> to vector<16x32xbf16>
    %cst_26 = arith.constant dense<0.000000e+00> : vector<16x96xf32>
    %53 = tpu.matmul %52, %45, %cst_26 {dimension_numbers = #tpu.dot_dimension_numbers<[1], [0], [0], [1], [0, 0, 1, 1], [], []>} : vector<16x32xbf16>, vector<32x96xbf16>, vector<16x96xf32> -> vector<16x96xf32>
    %c0_27 = arith.constant 0 : index
    %c0_28 = arith.constant 0 : index
    %c0_29 = arith.constant 0 : index
    %54 = vector.load %arg4[%c0_27, %c0_28, %c0_29] : memref<2x8x96xf32, #tpu.memory_space<vmem>>, vector<1x1x96xf32>
    %55 = vector.shape_cast %54 : vector<1x1x96xf32> to vector<1x96xf32>
    %56 = vector.broadcast %55 : vector<1x96xf32> to vector<16x96xf32>
    %57 = arith.addf %53, %56 : vector<16x96xf32>
    %58 = vector.shape_cast %57 : vector<16x96xf32> to vector<2x8x96xf32>
    %59 = arith.truncf %58 : vector<2x8x96xf32> to vector<2x8x96xbf16>
    %60 = vector.extract_strided_slice %59 {offsets = [0, 0, 0], sizes = [2, 8, 16], strides = [1, 1, 1]} : vector<2x8x96xbf16> to vector<2x8x16xbf16>
    %61 = vector.extract_strided_slice %59 {offsets = [0, 0, 32], sizes = [2, 8, 16], strides = [1, 1, 1]} : vector<2x8x96xbf16> to vector<2x8x16xbf16>
    %62 = vector.extract_strided_slice %59 {offsets = [0, 0, 64], sizes = [2, 8, 16], strides = [1, 1, 1]} : vector<2x8x96xbf16> to vector<2x8x16xbf16>
    "tpu.trace_start"() <{level = 10 : i32, message = "bqd,bkd->bqk"}> : () -> ()
    %cst_30 = arith.constant dense<0.000000e+00> : vector<2x8x8xf32>
    %63 = tpu.matmul %60, %61, %cst_30 {dimension_numbers = #tpu.dot_dimension_numbers<[2], [2], [1], [1], [0, 0, 0, 1, 1, 1], [0], [0]>} : vector<2x8x16xbf16>, vector<2x8x16xbf16>, vector<2x8x8xf32> -> vector<2x8x8xf32>
    "tpu.trace_stop"() : () -> ()
    %cst_31 = arith.constant 2.500000e-01 : f32
    %64 = vector.broadcast %cst_31 : f32 to vector<2x8x8xf32>
    %65 = arith.mulf %63, %64 : vector<2x8x8xf32>
    %66 = vector.broadcast %43 : vector<2x1x8xf32> to vector<2x8x8xf32>
    %67 = arith.addf %65, %66 : vector<2x8x8xf32>
    %cst_32 = arith.constant dense<0xFF800000> : vector<2x8xf32>
    %68 = vector.multi_reduction <maximumf>, %67, %cst_32 [2] : vector<2x8x8xf32> to vector<2x8xf32>
    %69 = vector.shape_cast %68 : vector<2x8xf32> to vector<2x8x1xf32>
    %70 = vector.broadcast %69 : vector<2x8x1xf32> to vector<2x8x8xf32>
    %71 = arith.subf %67, %70 : vector<2x8x8xf32>
    %72 = math.exp %71 : vector<2x8x8xf32>
    %cst_33 = arith.constant dense<0.000000e+00> : vector<2x8xf32>
    %73 = vector.multi_reduction <add>, %72, %cst_33 [2] : vector<2x8x8xf32> to vector<2x8xf32>
    %74 = vector.shape_cast %73 : vector<2x8xf32> to vector<2x8x1xf32>
    %75 = tpu.reciprocal %74 {approx = true} : vector<2x8x1xf32> -> vector<2x8x1xf32>
    %76 = vector.broadcast %75 : vector<2x8x1xf32> to vector<2x8x8xf32>
    %77 = arith.mulf %72, %76 : vector<2x8x8xf32>
    %78 = arith.truncf %77 : vector<2x8x8xf32> to vector<2x8x8xbf16>
    "tpu.trace_start"() <{level = 10 : i32, message = "bqk,bkd->bqd"}> : () -> ()
    %cst_34 = arith.constant dense<0.000000e+00> : vector<2x8x16xf32>
    %79 = tpu.matmul %78, %62, %cst_34 {dimension_numbers = #tpu.dot_dimension_numbers<[2], [1], [1], [2], [0, 0, 0, 1, 1, 2], [0], [0]>} : vector<2x8x8xbf16>, vector<2x8x16xbf16>, vector<2x8x16xf32> -> vector<2x8x16xf32>
    "tpu.trace_stop"() : () -> ()
    %80 = vector.extract_strided_slice %59 {offsets = [0, 0, 16], sizes = [2, 8, 16], strides = [1, 1, 1]} : vector<2x8x96xbf16> to vector<2x8x16xbf16>
    %81 = vector.extract_strided_slice %59 {offsets = [0, 0, 48], sizes = [2, 8, 16], strides = [1, 1, 1]} : vector<2x8x96xbf16> to vector<2x8x16xbf16>
    %82 = vector.extract_strided_slice %59 {offsets = [0, 0, 80], sizes = [2, 8, 16], strides = [1, 1, 1]} : vector<2x8x96xbf16> to vector<2x8x16xbf16>
    "tpu.trace_start"() <{level = 10 : i32, message = "bqd,bkd->bqk"}> : () -> ()
    %cst_35 = arith.constant dense<0.000000e+00> : vector<2x8x8xf32>
    %83 = tpu.matmul %80, %81, %cst_35 {dimension_numbers = #tpu.dot_dimension_numbers<[2], [2], [1], [1], [0, 0, 0, 1, 1, 1], [0], [0]>} : vector<2x8x16xbf16>, vector<2x8x16xbf16>, vector<2x8x8xf32> -> vector<2x8x8xf32>
    "tpu.trace_stop"() : () -> ()
    %cst_36 = arith.constant 2.500000e-01 : f32
    %84 = vector.broadcast %cst_36 : f32 to vector<2x8x8xf32>
    %85 = arith.mulf %83, %84 : vector<2x8x8xf32>
    %86 = vector.broadcast %43 : vector<2x1x8xf32> to vector<2x8x8xf32>
    %87 = arith.addf %85, %86 : vector<2x8x8xf32>
    %cst_37 = arith.constant dense<0xFF800000> : vector<2x8xf32>
    %88 = vector.multi_reduction <maximumf>, %87, %cst_37 [2] : vector<2x8x8xf32> to vector<2x8xf32>
    %89 = vector.shape_cast %88 : vector<2x8xf32> to vector<2x8x1xf32>
    %90 = vector.broadcast %89 : vector<2x8x1xf32> to vector<2x8x8xf32>
    %91 = arith.subf %87, %90 : vector<2x8x8xf32>
    %92 = math.exp %91 : vector<2x8x8xf32>
    %cst_38 = arith.constant dense<0.000000e+00> : vector<2x8xf32>
    %93 = vector.multi_reduction <add>, %92, %cst_38 [2] : vector<2x8x8xf32> to vector<2x8xf32>
    %94 = vector.shape_cast %93 : vector<2x8xf32> to vector<2x8x1xf32>
    %95 = tpu.reciprocal %94 {approx = true} : vector<2x8x1xf32> -> vector<2x8x1xf32>
    %96 = vector.broadcast %95 : vector<2x8x1xf32> to vector<2x8x8xf32>
    %97 = arith.mulf %92, %96 : vector<2x8x8xf32>
    %98 = arith.truncf %97 : vector<2x8x8xf32> to vector<2x8x8xbf16>
    "tpu.trace_start"() <{level = 10 : i32, message = "bqk,bkd->bqd"}> : () -> ()
    %cst_39 = arith.constant dense<0.000000e+00> : vector<2x8x16xf32>
    %99 = tpu.matmul %98, %82, %cst_39 {dimension_numbers = #tpu.dot_dimension_numbers<[2], [1], [1], [2], [0, 0, 0, 1, 1, 2], [0], [0]>} : vector<2x8x8xbf16>, vector<2x8x16xbf16>, vector<2x8x16xf32> -> vector<2x8x16xf32>
    "tpu.trace_stop"() : () -> ()
    %100 = tpu.concatenate %79, %99 in 2 : vector<2x8x16xf32>, vector<2x8x16xf32> -> vector<2x8x32xf32>
    %101 = vector.shape_cast %100 : vector<2x8x32xf32> to vector<16x32xf32>
    %102 = arith.truncf %101 : vector<16x32xf32> to vector<16x32xbf16>
    %cst_40 = arith.constant dense<0.000000e+00> : vector<16x32xf32>
    %103 = tpu.matmul %102, %47, %cst_40 {dimension_numbers = #tpu.dot_dimension_numbers<[1], [0], [0], [1], [0, 0, 1, 1], [], []>} : vector<16x32xbf16>, vector<32x32xbf16>, vector<16x32xf32> -> vector<16x32xf32>
    %c0_41 = arith.constant 0 : index
    %c1_42 = arith.constant 1 : index
    %c0_43 = arith.constant 0 : index
    %104 = vector.load %arg4[%c0_41, %c1_42, %c0_43] : memref<2x8x96xf32, #tpu.memory_space<vmem>>, vector<1x1x32xf32>
    %105 = vector.shape_cast %104 : vector<1x1x32xf32> to vector<1x32xf32>
    %106 = vector.broadcast %105 : vector<1x32xf32> to vector<16x32xf32>
    %107 = arith.addf %103, %106 : vector<16x32xf32>
    %108 = arith.addf %38, %107 : vector<16x32xf32>
    %c0_44 = arith.constant 0 : index
    %c2_45 = arith.constant 2 : index
    %c0_46 = arith.constant 0 : index
    %109 = vector.load %arg4[%c0_44, %c2_45, %c0_46] : memref<2x8x96xf32, #tpu.memory_space<vmem>>, vector<1x1x32xf32>
    %110 = vector.shape_cast %109 : vector<1x1x32xf32> to vector<1x32xf32>
    %c0_47 = arith.constant 0 : index
    %c3_48 = arith.constant 3 : index
    %c0_49 = arith.constant 0 : index
    %111 = vector.load %arg4[%c0_47, %c3_48, %c0_49] : memref<2x8x96xf32, #tpu.memory_space<vmem>>, vector<1x1x32xf32>
    %112 = vector.shape_cast %111 : vector<1x1x32xf32> to vector<1x32xf32>
    %cst_50 = arith.constant dense<0.000000e+00> : vector<16xf32>
    %113 = vector.multi_reduction <add>, %108, %cst_50 [1] : vector<16x32xf32> to vector<16xf32>
    %114 = vector.shape_cast %113 : vector<16xf32> to vector<16x1xf32>
    %cst_51 = arith.constant 3.200000e+01 : f32
    %115 = vector.broadcast %cst_51 : f32 to vector<16x1xf32>
    %116 = arith.divf %114, %115 : vector<16x1xf32>
    %117 = vector.broadcast %116 : vector<16x1xf32> to vector<16x32xf32>
    %118 = arith.subf %108, %117 : vector<16x32xf32>
    %119 = vector.broadcast %116 : vector<16x1xf32> to vector<16x32xf32>
    %120 = arith.subf %108, %119 : vector<16x32xf32>
    %121 = arith.mulf %118, %120 : vector<16x32xf32>
    %cst_52 = arith.constant dense<0.000000e+00> : vector<16xf32>
    %122 = vector.multi_reduction <add>, %121, %cst_52 [1] : vector<16x32xf32> to vector<16xf32>
    %123 = vector.shape_cast %122 : vector<16xf32> to vector<16x1xf32>
    %cst_53 = arith.constant 3.200000e+01 : f32
    %124 = vector.broadcast %cst_53 : f32 to vector<16x1xf32>
    %125 = arith.divf %123, %124 : vector<16x1xf32>
    %126 = vector.broadcast %116 : vector<16x1xf32> to vector<16x32xf32>
    %127 = arith.subf %108, %126 : vector<16x32xf32>
    %cst_54 = arith.constant 9.99999996E-13 : f32
    %128 = vector.broadcast %cst_54 : f32 to vector<16x1xf32>
    %129 = arith.addf %125, %128 : vector<16x1xf32>
    %130 = math.rsqrt %129 : vector<16x1xf32>
    %131 = vector.broadcast %130 : vector<16x1xf32> to vector<16x32xf32>
    %132 = arith.mulf %127, %131 : vector<16x32xf32>
    %133 = vector.broadcast %110 : vector<1x32xf32> to vector<16x32xf32>
    %134 = arith.mulf %132, %133 : vector<16x32xf32>
    %135 = vector.broadcast %112 : vector<1x32xf32> to vector<16x32xf32>
    %136 = arith.addf %134, %135 : vector<16x32xf32>
    %137 = arith.truncf %136 : vector<16x32xf32> to vector<16x32xbf16>
    %cst_55 = arith.constant dense<0.000000e+00> : vector<16x64xf32>
    %138 = tpu.matmul %137, %49, %cst_55 {dimension_numbers = #tpu.dot_dimension_numbers<[1], [0], [0], [1], [0, 0, 1, 1], [], []>} : vector<16x32xbf16>, vector<32x64xbf16>, vector<16x64xf32> -> vector<16x64xf32>
    %c0_56 = arith.constant 0 : index
    %c4 = arith.constant 4 : index
    %c0_57 = arith.constant 0 : index
    %139 = vector.load %arg4[%c0_56, %c4, %c0_57] : memref<2x8x96xf32, #tpu.memory_space<vmem>>, vector<1x1x64xf32>
    %140 = vector.shape_cast %139 : vector<1x1x64xf32> to vector<1x64xf32>
    %141 = vector.broadcast %140 : vector<1x64xf32> to vector<16x64xf32>
    %142 = arith.addf %138, %141 : vector<16x64xf32>
    %143 = arith.mulf %142, %142 : vector<16x64xf32>
    %144 = arith.mulf %142, %143 : vector<16x64xf32>
    %cst_58 = arith.constant 4.471500e-02 : f32
    %145 = vector.broadcast %cst_58 : f32 to vector<16x64xf32>
    %146 = arith.mulf %145, %144 : vector<16x64xf32>
    %147 = arith.addf %142, %146 : vector<16x64xf32>
    %cst_59 = arith.constant 0.797884583 : f32
    %148 = vector.broadcast %cst_59 : f32 to vector<16x64xf32>
    %149 = arith.mulf %148, %147 : vector<16x64xf32>
    %150 = math.tanh %149 : vector<16x64xf32>
    %cst_60 = arith.constant 1.000000e+00 : f32
    %151 = vector.broadcast %cst_60 : f32 to vector<16x64xf32>
    %152 = arith.addf %151, %150 : vector<16x64xf32>
    %cst_61 = arith.constant 5.000000e-01 : f32
    %153 = vector.broadcast %cst_61 : f32 to vector<16x64xf32>
    %154 = arith.mulf %153, %152 : vector<16x64xf32>
    %155 = arith.mulf %142, %154 : vector<16x64xf32>
    %156 = arith.truncf %155 : vector<16x64xf32> to vector<16x64xbf16>
    %cst_62 = arith.constant dense<0.000000e+00> : vector<16x32xf32>
    %157 = tpu.matmul %156, %51, %cst_62 {dimension_numbers = #tpu.dot_dimension_numbers<[1], [0], [0], [1], [0, 0, 1, 1], [], []>} : vector<16x64xbf16>, vector<64x32xbf16>, vector<16x32xf32> -> vector<16x32xf32>
    %c0_63 = arith.constant 0 : index
    %c5 = arith.constant 5 : index
    %c0_64 = arith.constant 0 : index
    %158 = vector.load %arg4[%c0_63, %c5, %c0_64] : memref<2x8x96xf32, #tpu.memory_space<vmem>>, vector<1x1x32xf32>
    %159 = vector.shape_cast %158 : vector<1x1x32xf32> to vector<1x32xf32>
    %160 = vector.broadcast %159 : vector<1x32xf32> to vector<16x32xf32>
    %161 = arith.addf %157, %160 : vector<16x32xf32>
    %162 = arith.addf %136, %161 : vector<16x32xf32>
    %c0_65 = arith.constant 0 : index
    %c6 = arith.constant 6 : index
    %c0_66 = arith.constant 0 : index
    %163 = vector.load %arg4[%c0_65, %c6, %c0_66] : memref<2x8x96xf32, #tpu.memory_space<vmem>>, vector<1x1x32xf32>
    %164 = vector.shape_cast %163 : vector<1x1x32xf32> to vector<1x32xf32>
    %c0_67 = arith.constant 0 : index
    %c7 = arith.constant 7 : index
    %c0_68 = arith.constant 0 : index
    %165 = vector.load %arg4[%c0_67, %c7, %c0_68] : memref<2x8x96xf32, #tpu.memory_space<vmem>>, vector<1x1x32xf32>
    %166 = vector.shape_cast %165 : vector<1x1x32xf32> to vector<1x32xf32>
    %cst_69 = arith.constant dense<0.000000e+00> : vector<16xf32>
    %167 = vector.multi_reduction <add>, %162, %cst_69 [1] : vector<16x32xf32> to vector<16xf32>
    %168 = vector.shape_cast %167 : vector<16xf32> to vector<16x1xf32>
    %cst_70 = arith.constant 3.200000e+01 : f32
    %169 = vector.broadcast %cst_70 : f32 to vector<16x1xf32>
    %170 = arith.divf %168, %169 : vector<16x1xf32>
    %171 = vector.broadcast %170 : vector<16x1xf32> to vector<16x32xf32>
    %172 = arith.subf %162, %171 : vector<16x32xf32>
    %173 = vector.broadcast %170 : vector<16x1xf32> to vector<16x32xf32>
    %174 = arith.subf %162, %173 : vector<16x32xf32>
    %175 = arith.mulf %172, %174 : vector<16x32xf32>
    %cst_71 = arith.constant dense<0.000000e+00> : vector<16xf32>
    %176 = vector.multi_reduction <add>, %175, %cst_71 [1] : vector<16x32xf32> to vector<16xf32>
    %177 = vector.shape_cast %176 : vector<16xf32> to vector<16x1xf32>
    %cst_72 = arith.constant 3.200000e+01 : f32
    %178 = vector.broadcast %cst_72 : f32 to vector<16x1xf32>
    %179 = arith.divf %177, %178 : vector<16x1xf32>
    %180 = vector.broadcast %170 : vector<16x1xf32> to vector<16x32xf32>
    %181 = arith.subf %162, %180 : vector<16x32xf32>
    %cst_73 = arith.constant 9.99999996E-13 : f32
    %182 = vector.broadcast %cst_73 : f32 to vector<16x1xf32>
    %183 = arith.addf %179, %182 : vector<16x1xf32>
    %184 = math.rsqrt %183 : vector<16x1xf32>
    %185 = vector.broadcast %184 : vector<16x1xf32> to vector<16x32xf32>
    %186 = arith.mulf %181, %185 : vector<16x32xf32>
    %187 = vector.broadcast %164 : vector<1x32xf32> to vector<16x32xf32>
    %188 = arith.mulf %186, %187 : vector<16x32xf32>
    %189 = vector.broadcast %166 : vector<1x32xf32> to vector<16x32xf32>
    %190 = arith.addf %188, %189 : vector<16x32xf32>
    %c4_74 = arith.constant 4 : index
    %c0_75 = arith.constant 0 : index
    %c0_76 = arith.constant 0 : index
    %191 = vector.load %arg5[%c4_74, %c0_75, %c0_76] : memref<9x64x96xbf16, #tpu.memory_space<vmem>>, vector<1x32x96xbf16>
    %192 = vector.shape_cast %191 : vector<1x32x96xbf16> to vector<32x96xbf16>
    %c5_77 = arith.constant 5 : index
    %c0_78 = arith.constant 0 : index
    %c0_79 = arith.constant 0 : index
    %193 = vector.load %arg5[%c5_77, %c0_78, %c0_79] : memref<9x64x96xbf16, #tpu.memory_space<vmem>>, vector<1x32x32xbf16>
    %194 = vector.shape_cast %193 : vector<1x32x32xbf16> to vector<32x32xbf16>
    %c6_80 = arith.constant 6 : index
    %c0_81 = arith.constant 0 : index
    %c0_82 = arith.constant 0 : index
    %195 = vector.load %arg5[%c6_80, %c0_81, %c0_82] : memref<9x64x96xbf16, #tpu.memory_space<vmem>>, vector<1x32x64xbf16>
    %196 = vector.shape_cast %195 : vector<1x32x64xbf16> to vector<32x64xbf16>
    %c7_83 = arith.constant 7 : index
    %c0_84 = arith.constant 0 : index
    %c0_85 = arith.constant 0 : index
    %197 = vector.load %arg5[%c7_83, %c0_84, %c0_85] : memref<9x64x96xbf16, #tpu.memory_space<vmem>>, vector<1x64x32xbf16>
    %198 = vector.shape_cast %197 : vector<1x64x32xbf16> to vector<64x32xbf16>
    %199 = arith.truncf %190 : vector<16x32xf32> to vector<16x32xbf16>
    %cst_86 = arith.constant dense<0.000000e+00> : vector<16x96xf32>
    %200 = tpu.matmul %199, %192, %cst_86 {dimension_numbers = #tpu.dot_dimension_numbers<[1], [0], [0], [1], [0, 0, 1, 1], [], []>} : vector<16x32xbf16>, vector<32x96xbf16>, vector<16x96xf32> -> vector<16x96xf32>
    %c1_87 = arith.constant 1 : index
    %c0_88 = arith.constant 0 : index
    %c0_89 = arith.constant 0 : index
    %201 = vector.load %arg4[%c1_87, %c0_88, %c0_89] : memref<2x8x96xf32, #tpu.memory_space<vmem>>, vector<1x1x96xf32>
    %202 = vector.shape_cast %201 : vector<1x1x96xf32> to vector<1x96xf32>
    %203 = vector.broadcast %202 : vector<1x96xf32> to vector<16x96xf32>
    %204 = arith.addf %200, %203 : vector<16x96xf32>
    %205 = vector.shape_cast %204 : vector<16x96xf32> to vector<2x8x96xf32>
    %206 = arith.truncf %205 : vector<2x8x96xf32> to vector<2x8x96xbf16>
    %207 = vector.extract_strided_slice %206 {offsets = [0, 0, 0], sizes = [2, 8, 16], strides = [1, 1, 1]} : vector<2x8x96xbf16> to vector<2x8x16xbf16>
    %208 = vector.extract_strided_slice %206 {offsets = [0, 0, 32], sizes = [2, 8, 16], strides = [1, 1, 1]} : vector<2x8x96xbf16> to vector<2x8x16xbf16>
    %209 = vector.extract_strided_slice %206 {offsets = [0, 0, 64], sizes = [2, 8, 16], strides = [1, 1, 1]} : vector<2x8x96xbf16> to vector<2x8x16xbf16>
    "tpu.trace_start"() <{level = 10 : i32, message = "bqd,bkd->bqk"}> : () -> ()
    %cst_90 = arith.constant dense<0.000000e+00> : vector<2x8x8xf32>
    %210 = tpu.matmul %207, %208, %cst_90 {dimension_numbers = #tpu.dot_dimension_numbers<[2], [2], [1], [1], [0, 0, 0, 1, 1, 1], [0], [0]>} : vector<2x8x16xbf16>, vector<2x8x16xbf16>, vector<2x8x8xf32> -> vector<2x8x8xf32>
    "tpu.trace_stop"() : () -> ()
    %cst_91 = arith.constant 2.500000e-01 : f32
    %211 = vector.broadcast %cst_91 : f32 to vector<2x8x8xf32>
    %212 = arith.mulf %210, %211 : vector<2x8x8xf32>
    %213 = vector.broadcast %43 : vector<2x1x8xf32> to vector<2x8x8xf32>
    %214 = arith.addf %212, %213 : vector<2x8x8xf32>
    %cst_92 = arith.constant dense<0xFF800000> : vector<2x8xf32>
    %215 = vector.multi_reduction <maximumf>, %214, %cst_92 [2] : vector<2x8x8xf32> to vector<2x8xf32>
    %216 = vector.shape_cast %215 : vector<2x8xf32> to vector<2x8x1xf32>
    %217 = vector.broadcast %216 : vector<2x8x1xf32> to vector<2x8x8xf32>
    %218 = arith.subf %214, %217 : vector<2x8x8xf32>
    %219 = math.exp %218 : vector<2x8x8xf32>
    %cst_93 = arith.constant dense<0.000000e+00> : vector<2x8xf32>
    %220 = vector.multi_reduction <add>, %219, %cst_93 [2] : vector<2x8x8xf32> to vector<2x8xf32>
    %221 = vector.shape_cast %220 : vector<2x8xf32> to vector<2x8x1xf32>
    %222 = tpu.reciprocal %221 {approx = true} : vector<2x8x1xf32> -> vector<2x8x1xf32>
    %223 = vector.broadcast %222 : vector<2x8x1xf32> to vector<2x8x8xf32>
    %224 = arith.mulf %219, %223 : vector<2x8x8xf32>
    %225 = arith.truncf %224 : vector<2x8x8xf32> to vector<2x8x8xbf16>
    "tpu.trace_start"() <{level = 10 : i32, message = "bqk,bkd->bqd"}> : () -> ()
    %cst_94 = arith.constant dense<0.000000e+00> : vector<2x8x16xf32>
    %226 = tpu.matmul %225, %209, %cst_94 {dimension_numbers = #tpu.dot_dimension_numbers<[2], [1], [1], [2], [0, 0, 0, 1, 1, 2], [0], [0]>} : vector<2x8x8xbf16>, vector<2x8x16xbf16>, vector<2x8x16xf32> -> vector<2x8x16xf32>
    "tpu.trace_stop"() : () -> ()
    %227 = vector.extract_strided_slice %206 {offsets = [0, 0, 16], sizes = [2, 8, 16], strides = [1, 1, 1]} : vector<2x8x96xbf16> to vector<2x8x16xbf16>
    %228 = vector.extract_strided_slice %206 {offsets = [0, 0, 48], sizes = [2, 8, 16], strides = [1, 1, 1]} : vector<2x8x96xbf16> to vector<2x8x16xbf16>
    %229 = vector.extract_strided_slice %206 {offsets = [0, 0, 80], sizes = [2, 8, 16], strides = [1, 1, 1]} : vector<2x8x96xbf16> to vector<2x8x16xbf16>
    "tpu.trace_start"() <{level = 10 : i32, message = "bqd,bkd->bqk"}> : () -> ()
    %cst_95 = arith.constant dense<0.000000e+00> : vector<2x8x8xf32>
    %230 = tpu.matmul %227, %228, %cst_95 {dimension_numbers = #tpu.dot_dimension_numbers<[2], [2], [1], [1], [0, 0, 0, 1, 1, 1], [0], [0]>} : vector<2x8x16xbf16>, vector<2x8x16xbf16>, vector<2x8x8xf32> -> vector<2x8x8xf32>
    "tpu.trace_stop"() : () -> ()
    %cst_96 = arith.constant 2.500000e-01 : f32
    %231 = vector.broadcast %cst_96 : f32 to vector<2x8x8xf32>
    %232 = arith.mulf %230, %231 : vector<2x8x8xf32>
    %233 = vector.broadcast %43 : vector<2x1x8xf32> to vector<2x8x8xf32>
    %234 = arith.addf %232, %233 : vector<2x8x8xf32>
    %cst_97 = arith.constant dense<0xFF800000> : vector<2x8xf32>
    %235 = vector.multi_reduction <maximumf>, %234, %cst_97 [2] : vector<2x8x8xf32> to vector<2x8xf32>
    %236 = vector.shape_cast %235 : vector<2x8xf32> to vector<2x8x1xf32>
    %237 = vector.broadcast %236 : vector<2x8x1xf32> to vector<2x8x8xf32>
    %238 = arith.subf %234, %237 : vector<2x8x8xf32>
    %239 = math.exp %238 : vector<2x8x8xf32>
    %cst_98 = arith.constant dense<0.000000e+00> : vector<2x8xf32>
    %240 = vector.multi_reduction <add>, %239, %cst_98 [2] : vector<2x8x8xf32> to vector<2x8xf32>
    %241 = vector.shape_cast %240 : vector<2x8xf32> to vector<2x8x1xf32>
    %242 = tpu.reciprocal %241 {approx = true} : vector<2x8x1xf32> -> vector<2x8x1xf32>
    %243 = vector.broadcast %242 : vector<2x8x1xf32> to vector<2x8x8xf32>
    %244 = arith.mulf %239, %243 : vector<2x8x8xf32>
    %245 = arith.truncf %244 : vector<2x8x8xf32> to vector<2x8x8xbf16>
    "tpu.trace_start"() <{level = 10 : i32, message = "bqk,bkd->bqd"}> : () -> ()
    %cst_99 = arith.constant dense<0.000000e+00> : vector<2x8x16xf32>
    %246 = tpu.matmul %245, %229, %cst_99 {dimension_numbers = #tpu.dot_dimension_numbers<[2], [1], [1], [2], [0, 0, 0, 1, 1, 2], [0], [0]>} : vector<2x8x8xbf16>, vector<2x8x16xbf16>, vector<2x8x16xf32> -> vector<2x8x16xf32>
    "tpu.trace_stop"() : () -> ()
    %247 = tpu.concatenate %226, %246 in 2 : vector<2x8x16xf32>, vector<2x8x16xf32> -> vector<2x8x32xf32>
    %248 = vector.shape_cast %247 : vector<2x8x32xf32> to vector<16x32xf32>
    %249 = arith.truncf %248 : vector<16x32xf32> to vector<16x32xbf16>
    %cst_100 = arith.constant dense<0.000000e+00> : vector<16x32xf32>
    %250 = tpu.matmul %249, %194, %cst_100 {dimension_numbers = #tpu.dot_dimension_numbers<[1], [0], [0], [1], [0, 0, 1, 1], [], []>} : vector<16x32xbf16>, vector<32x32xbf16>, vector<16x32xf32> -> vector<16x32xf32>
    %c1_101 = arith.constant 1 : index
    %c1_102 = arith.constant 1 : index
    %c0_103 = arith.constant 0 : index
    %251 = vector.load %arg4[%c1_101, %c1_102, %c0_103] : memref<2x8x96xf32, #tpu.memory_space<vmem>>, vector<1x1x32xf32>
    %252 = vector.shape_cast %251 : vector<1x1x32xf32> to vector<1x32xf32>
    %253 = vector.broadcast %252 : vector<1x32xf32> to vector<16x32xf32>
    %254 = arith.addf %250, %253 : vector<16x32xf32>
    %255 = arith.addf %190, %254 : vector<16x32xf32>
    %c1_104 = arith.constant 1 : index
    %c2_105 = arith.constant 2 : index
    %c0_106 = arith.constant 0 : index
    %256 = vector.load %arg4[%c1_104, %c2_105, %c0_106] : memref<2x8x96xf32, #tpu.memory_space<vmem>>, vector<1x1x32xf32>
    %257 = vector.shape_cast %256 : vector<1x1x32xf32> to vector<1x32xf32>
    %c1_107 = arith.constant 1 : index
    %c3_108 = arith.constant 3 : index
    %c0_109 = arith.constant 0 : index
    %258 = vector.load %arg4[%c1_107, %c3_108, %c0_109] : memref<2x8x96xf32, #tpu.memory_space<vmem>>, vector<1x1x32xf32>
    %259 = vector.shape_cast %258 : vector<1x1x32xf32> to vector<1x32xf32>
    %cst_110 = arith.constant dense<0.000000e+00> : vector<16xf32>
    %260 = vector.multi_reduction <add>, %255, %cst_110 [1] : vector<16x32xf32> to vector<16xf32>
    %261 = vector.shape_cast %260 : vector<16xf32> to vector<16x1xf32>
    %cst_111 = arith.constant 3.200000e+01 : f32
    %262 = vector.broadcast %cst_111 : f32 to vector<16x1xf32>
    %263 = arith.divf %261, %262 : vector<16x1xf32>
    %264 = vector.broadcast %263 : vector<16x1xf32> to vector<16x32xf32>
    %265 = arith.subf %255, %264 : vector<16x32xf32>
    %266 = vector.broadcast %263 : vector<16x1xf32> to vector<16x32xf32>
    %267 = arith.subf %255, %266 : vector<16x32xf32>
    %268 = arith.mulf %265, %267 : vector<16x32xf32>
    %cst_112 = arith.constant dense<0.000000e+00> : vector<16xf32>
    %269 = vector.multi_reduction <add>, %268, %cst_112 [1] : vector<16x32xf32> to vector<16xf32>
    %270 = vector.shape_cast %269 : vector<16xf32> to vector<16x1xf32>
    %cst_113 = arith.constant 3.200000e+01 : f32
    %271 = vector.broadcast %cst_113 : f32 to vector<16x1xf32>
    %272 = arith.divf %270, %271 : vector<16x1xf32>
    %273 = vector.broadcast %263 : vector<16x1xf32> to vector<16x32xf32>
    %274 = arith.subf %255, %273 : vector<16x32xf32>
    %cst_114 = arith.constant 9.99999996E-13 : f32
    %275 = vector.broadcast %cst_114 : f32 to vector<16x1xf32>
    %276 = arith.addf %272, %275 : vector<16x1xf32>
    %277 = math.rsqrt %276 : vector<16x1xf32>
    %278 = vector.broadcast %277 : vector<16x1xf32> to vector<16x32xf32>
    %279 = arith.mulf %274, %278 : vector<16x32xf32>
    %280 = vector.broadcast %257 : vector<1x32xf32> to vector<16x32xf32>
    %281 = arith.mulf %279, %280 : vector<16x32xf32>
    %282 = vector.broadcast %259 : vector<1x32xf32> to vector<16x32xf32>
    %283 = arith.addf %281, %282 : vector<16x32xf32>
    %284 = arith.truncf %283 : vector<16x32xf32> to vector<16x32xbf16>
    %cst_115 = arith.constant dense<0.000000e+00> : vector<16x64xf32>
    %285 = tpu.matmul %284, %196, %cst_115 {dimension_numbers = #tpu.dot_dimension_numbers<[1], [0], [0], [1], [0, 0, 1, 1], [], []>} : vector<16x32xbf16>, vector<32x64xbf16>, vector<16x64xf32> -> vector<16x64xf32>
    %c1_116 = arith.constant 1 : index
    %c4_117 = arith.constant 4 : index
    %c0_118 = arith.constant 0 : index
    %286 = vector.load %arg4[%c1_116, %c4_117, %c0_118] : memref<2x8x96xf32, #tpu.memory_space<vmem>>, vector<1x1x64xf32>
    %287 = vector.shape_cast %286 : vector<1x1x64xf32> to vector<1x64xf32>
    %288 = vector.broadcast %287 : vector<1x64xf32> to vector<16x64xf32>
    %289 = arith.addf %285, %288 : vector<16x64xf32>
    %290 = arith.mulf %289, %289 : vector<16x64xf32>
    %291 = arith.mulf %289, %290 : vector<16x64xf32>
    %cst_119 = arith.constant 4.471500e-02 : f32
    %292 = vector.broadcast %cst_119 : f32 to vector<16x64xf32>
    %293 = arith.mulf %292, %291 : vector<16x64xf32>
    %294 = arith.addf %289, %293 : vector<16x64xf32>
    %cst_120 = arith.constant 0.797884583 : f32
    %295 = vector.broadcast %cst_120 : f32 to vector<16x64xf32>
    %296 = arith.mulf %295, %294 : vector<16x64xf32>
    %297 = math.tanh %296 : vector<16x64xf32>
    %cst_121 = arith.constant 1.000000e+00 : f32
    %298 = vector.broadcast %cst_121 : f32 to vector<16x64xf32>
    %299 = arith.addf %298, %297 : vector<16x64xf32>
    %cst_122 = arith.constant 5.000000e-01 : f32
    %300 = vector.broadcast %cst_122 : f32 to vector<16x64xf32>
    %301 = arith.mulf %300, %299 : vector<16x64xf32>
    %302 = arith.mulf %289, %301 : vector<16x64xf32>
    %303 = arith.truncf %302 : vector<16x64xf32> to vector<16x64xbf16>
    %cst_123 = arith.constant dense<0.000000e+00> : vector<16x32xf32>
    %304 = tpu.matmul %303, %198, %cst_123 {dimension_numbers = #tpu.dot_dimension_numbers<[1], [0], [0], [1], [0, 0, 1, 1], [], []>} : vector<16x64xbf16>, vector<64x32xbf16>, vector<16x32xf32> -> vector<16x32xf32>
    %c1_124 = arith.constant 1 : index
    %c5_125 = arith.constant 5 : index
    %c0_126 = arith.constant 0 : index
    %305 = vector.load %arg4[%c1_124, %c5_125, %c0_126] : memref<2x8x96xf32, #tpu.memory_space<vmem>>, vector<1x1x32xf32>
    %306 = vector.shape_cast %305 : vector<1x1x32xf32> to vector<1x32xf32>
    %307 = vector.broadcast %306 : vector<1x32xf32> to vector<16x32xf32>
    %308 = arith.addf %304, %307 : vector<16x32xf32>
    %309 = arith.addf %283, %308 : vector<16x32xf32>
    %c1_127 = arith.constant 1 : index
    %c6_128 = arith.constant 6 : index
    %c0_129 = arith.constant 0 : index
    %310 = vector.load %arg4[%c1_127, %c6_128, %c0_129] : memref<2x8x96xf32, #tpu.memory_space<vmem>>, vector<1x1x32xf32>
    %311 = vector.shape_cast %310 : vector<1x1x32xf32> to vector<1x32xf32>
    %c1_130 = arith.constant 1 : index
    %c7_131 = arith.constant 7 : index
    %c0_132 = arith.constant 0 : index
    %312 = vector.load %arg4[%c1_130, %c7_131, %c0_132] : memref<2x8x96xf32, #tpu.memory_space<vmem>>, vector<1x1x32xf32>
    %313 = vector.shape_cast %312 : vector<1x1x32xf32> to vector<1x32xf32>
    %cst_133 = arith.constant dense<0.000000e+00> : vector<16xf32>
    %314 = vector.multi_reduction <add>, %309, %cst_133 [1] : vector<16x32xf32> to vector<16xf32>
    %315 = vector.shape_cast %314 : vector<16xf32> to vector<16x1xf32>
    %cst_134 = arith.constant 3.200000e+01 : f32
    %316 = vector.broadcast %cst_134 : f32 to vector<16x1xf32>
    %317 = arith.divf %315, %316 : vector<16x1xf32>
    %318 = vector.broadcast %317 : vector<16x1xf32> to vector<16x32xf32>
    %319 = arith.subf %309, %318 : vector<16x32xf32>
    %320 = vector.broadcast %317 : vector<16x1xf32> to vector<16x32xf32>
    %321 = arith.subf %309, %320 : vector<16x32xf32>
    %322 = arith.mulf %319, %321 : vector<16x32xf32>
    %cst_135 = arith.constant dense<0.000000e+00> : vector<16xf32>
    %323 = vector.multi_reduction <add>, %322, %cst_135 [1] : vector<16x32xf32> to vector<16xf32>
    %324 = vector.shape_cast %323 : vector<16xf32> to vector<16x1xf32>
    %cst_136 = arith.constant 3.200000e+01 : f32
    %325 = vector.broadcast %cst_136 : f32 to vector<16x1xf32>
    %326 = arith.divf %324, %325 : vector<16x1xf32>
    %327 = vector.broadcast %317 : vector<16x1xf32> to vector<16x32xf32>
    %328 = arith.subf %309, %327 : vector<16x32xf32>
    %cst_137 = arith.constant 9.99999996E-13 : f32
    %329 = vector.broadcast %cst_137 : f32 to vector<16x1xf32>
    %330 = arith.addf %326, %329 : vector<16x1xf32>
    %331 = math.rsqrt %330 : vector<16x1xf32>
    %332 = vector.broadcast %331 : vector<16x1xf32> to vector<16x32xf32>
    %333 = arith.mulf %328, %332 : vector<16x32xf32>
    %334 = vector.broadcast %311 : vector<1x32xf32> to vector<16x32xf32>
    %335 = arith.mulf %333, %334 : vector<16x32xf32>
    %336 = vector.broadcast %313 : vector<1x32xf32> to vector<16x32xf32>
    %337 = arith.addf %335, %336 : vector<16x32xf32>
    %338 = vector.shape_cast %337 : vector<16x32xf32> to vector<2x8x32xf32>
    %cst_138 = arith.constant dense<0.000000e+00> : vector<2x32xf32>
    %339 = vector.multi_reduction <add>, %338, %cst_138 [1] : vector<2x8x32xf32> to vector<2x32xf32>
    %cst_139 = arith.constant 8.000000e+00 : f32
    %340 = vector.broadcast %cst_139 : f32 to vector<2x32xf32>
    %341 = arith.divf %339, %340 : vector<2x32xf32>
    %c19 = arith.constant 19 : index
    %c0_140 = arith.constant 0 : index
    %342 = vector.load %arg3[%c19, %c0_140] : memref<21x32xf32, #tpu.memory_space<vmem>>, vector<2x32xf32>
    %cst_141 = arith.constant dense<0.000000e+00> : vector<2x2xf32>
    %343 = tpu.matmul %341, %342, %cst_141 {dimension_numbers = #tpu.dot_dimension_numbers<[1], [1], [0], [0], [0, 0, 1, 0], [], []>} : vector<2x32xf32>, vector<2x32xf32>, vector<2x2xf32> -> vector<2x2xf32>
    %c18 = arith.constant 18 : index
    %c0_142 = arith.constant 0 : index
    %344 = vector.load %arg3[%c18, %c0_142] : memref<21x32xf32, #tpu.memory_space<vmem>>, vector<1x2xf32>
    %345 = vector.broadcast %344 : vector<1x2xf32> to vector<2x2xf32>
    %346 = arith.addf %343, %345 : vector<2x2xf32>
    %c0_143 = arith.constant 0 : index
    %c0_144 = arith.constant 0 : index
    %347 = vector.load %arg6[%c0_143, %c0_144] : memref<2x2xf32, #tpu.memory_space<vmem>>, vector<2x2xf32>
    tpu.vector_store %arg6[%c0_143, %c0_144], %346 {strides = array<i32>} : memref<2x2xf32, #tpu.memory_space<vmem>>, vector<2x2xf32>,
    return
  }
  func.func @transform_0(%arg0: i32) -> (i32, i32) {
    %c0_i32 = arith.constant 0 : i32
    %c0_i32_0 = arith.constant 0 : i32
    %c0_i32_1 = arith.constant 0 : i32
    return %c0_i32, %c0_i32_0 : i32, i32
  }
  func.func @transform_1(%arg0: i32) -> (i32, i32, i32) {
    %c0_i32 = arith.constant 0 : i32
    %c0_i32_0 = arith.constant 0 : i32
    %c0_i32_1 = arith.constant 0 : i32
    %c0_i32_2 = arith.constant 0 : i32
    return %c0_i32, %c0_i32_0, %c0_i32_1 : i32, i32, i32
  }
  func.func @transform_2(%arg0: i32) -> (i32, i32) {
    %c0_i32 = arith.constant 0 : i32
    %c0_i32_0 = arith.constant 0 : i32
    %c0_i32_1 = arith.constant 0 : i32
    return %c0_i32, %c0_i32_0 : i32, i32
  }
  func.func @transform_3(%arg0: i32) -> (i32, i32, i32) {
    %c0_i32 = arith.constant 0 : i32
    %c0_i32_0 = arith.constant 0 : i32
    %c0_i32_1 = arith.constant 0 : i32
    %c0_i32_2 = arith.constant 0 : i32
    return %c0_i32, %c0_i32_0, %c0_i32_1 : i32, i32, i32
  }
  func.func @transform_4(%arg0: i32) -> (i32, i32, i32) {
    %c0_i32 = arith.constant 0 : i32
    %c0_i32_0 = arith.constant 0 : i32
    %c0_i32_1 = arith.constant 0 : i32
    %c0_i32_2 = arith.constant 0 : i32
    return %c0_i32, %c0_i32_0, %c0_i32_1 : i32, i32, i32
  }
  func.func @transform_5(%arg0: i32) -> (i32, i32) {
    %c0_i32 = arith.constant 0 : i32
    %c0_i32_0 = arith.constant 0 : i32
    %c0_i32_1 = arith.constant 0 : i32
    return %c0_i32, %c0_i32_0 : i32, i32
  }
}

</mosaic_0001>

<llo_original>
// kernel: model_forward.1
$region0: #{model_forward.1}
  #allocation0 [shape = 'u32[]', space=smem, size = 0x4, offset = 0x4, fixed_abs, tag = 'smem constant byte address 0x4 - core index']
  #allocation1 [shape = 'u32[72,128]{1,0:T(1,128)}', space=vmem, size = 0x9000, scoped, tag = 'internal scratch']
  %s0 = inlined_call_operand.vmem [shape: s32[16,1], index: 0, kind: input, shape index: {}]
  %s1 = inlined_call_operand.vmem [shape: f32[2,1,8], index: 1, kind: input, shape index: {}]
  %s2 = inlined_call_operand.hbm [shape: f32[21,32], index: 2, kind: input, shape index: {}]
  %s3 = inlined_call_operand.vmem [shape: f32[2,8,96], index: 3, kind: input, shape index: {}]
  %s4 = inlined_call_operand.hbm [shape: bf16[9,64,96], index: 4, kind: input, shape index: {}]
  %s5 = inlined_call_operand.hbm [shape: f32[2,2], index: 5, kind: output, shape index: {}]
  %s6 = sld [smem:[#allocation0]]
  $region38: #{model_forward.1} parent=0
    _
  %s8 = ssub.s32 1, %s6
  %s9 = scalar_select 0, %s8, %s6
  $region1: #{model_forward.1} parent=0
    #allocation2 [shape = 'u8[12288]{0}', space=vmem, size = 0x3000, scoped, tag = 'input window, operand 2, single buffered']
    #allocation3 [shape = 's32[1]{0}', space=sflag, size = 0x4, scoped, tag = 'scoped memory for model_forward.1']
    #allocation4 [shape = 's32[1]{0}', space=sflag, size = 0x4, scoped, tag = 'scoped memory for model_forward.1']
    #allocation5 [shape = 'u8[147456]{0}', space=vmem, size = 0x24000, scoped, tag = 'input window, operand 4, single buffered']
    #allocation6 [shape = 's32[1]{0}', space=sflag, size = 0x4, scoped, tag = 'scoped memory for model_forward.1']
    #allocation7 [shape = 'u8[1024]{0}', space=vmem, size = 0x400, scoped, tag = 'output window, operand 0, single buffered']
    %10 = vsyncpa [#allocation3], 0
    %11 = vsyncpa [#allocation6], 0
    %12 = vsyncpa [#allocation4], 0
    // Predicated region
    $region2: #{model_forward.1} parent=1 // pred_check
      _
    $region3: #{model_forward.1} parent=1 // pred_check_branch
      %14 = sbr.rel (0) target = $region5
    $region4: #{model_forward.1} parent=1 // pred_region
      _
    $region5: #{model_forward.1} parent=1 // pred_fallthru
      _
    // Predicated region
    $region6: #{model_forward.1} parent=1 // pred_check
      _
    $region7: #{model_forward.1} parent=1 // pred_check_branch
      %16 = sbr.rel (0) target = $region9
    $region8: #{model_forward.1} parent=1 // pred_region
      _
    $region9: #{model_forward.1} parent=1 // pred_fallthru
      _
    // Predicated region
    $region10: #{model_forward.1} parent=1 // pred_check
      _
    $region11: #{model_forward.1} parent=1 // pred_check_branch
      %18 = sbr.rel (0) target = $region13
    $region12: #{model_forward.1} parent=1 // pred_region
      %20 = vsyncadd [#allocation3], 0
      %s21 = sshll.u32 %s2, 4
      %s22 = int_to_ptr.hbm [resolvable:$true] %s21
      %s23 = sshll.u32 [#allocation2], 4
      %s24 = int_to_ptr.vmem [resolvable:$true] %s23
      %29 = dma.hbm_to_vmem [thread:$0]  %s22, 384, %s24, [#allocation3], 128, 128, 8
    $region13: #{model_forward.1} parent=1 // pred_fallthru
      _
    // Predicated region
    $region14: #{model_forward.1} parent=1 // pred_check
      _
    $region15: #{model_forward.1} parent=1 // pred_check_branch
      %31 = sbr.rel (0) target = $region17
    $region16: #{model_forward.1} parent=1 // pred_region
      _
    $region17: #{model_forward.1} parent=1 // pred_fallthru
      _
    // Predicated region
    $region18: #{model_forward.1} parent=1 // pred_check
      _
    $region19: #{model_forward.1} parent=1 // pred_check_branch
      %33 = sbr.rel (0) target = $region21
    $region20: #{model_forward.1} parent=1 // pred_region
      %35 = vsyncadd [#allocation6], 0
      %s36 = sshll.u32 %s4, 4
      %s37 = int_to_ptr.hbm [resolvable:$true] %s36
      %s38 = sshll.u32 [#allocation5], 4
      %s39 = int_to_ptr.vmem [resolvable:$true] %s38
      %44 = dma.hbm_to_vmem [thread:$0]  %s37, 4608, %s39, [#allocation6], 64, 64, 4
    $region21: #{model_forward.1} parent=1 // pred_fallthru
      _
    // Predicated region
    $region22: #{model_forward.1} parent=1 // pred_check
      _
    $region23: #{model_forward.1} parent=1 // pred_check_branch
      %46 = sbr.rel (0) target = $region25
    $region24: #{model_forward.1} parent=1 // pred_region
      %48 = dma.done [#allocation3], 384
    $region25: #{model_forward.1} parent=1 // pred_fallthru
      _
    // Predicated region
    $region26: #{model_forward.1} parent=1 // pred_check
      _
    $region27: #{model_forward.1} parent=1 // pred_check_branch
      %50 = sbr.rel (0) target = $region29
    $region28: #{model_forward.1} parent=1 // pred_region
      %52 = dma.done [#allocation6], 4608
    $region29: #{model_forward.1} parent=1 // pred_fallthru
      _
    %s54 = scalar_lea.vmem [#allocation5], 256
    %v55 = vld [vmem:[%s54] sm:$0xf]
    %v56 = vld [vmem:[%s54 + $0x4] sm:$0xf]
    %v57 = vld [vmem:[%s54 + $0x8] sm:$0xf]
    %v58 = vld [vmem:[%s54 + $0xc] sm:$0xf]
    %v59 = vld [vmem:[%s54 + $0x10] sm:$0xf]
    %v60 = vld [vmem:[%s54 + $0x14] sm:$0xf]
    %v61 = vld [vmem:[%s54 + $0x18] sm:$0x1]
    %v62 = vld [vmem:[%s0] sm:$0xff]
    %v63 = vld [vmem:[%s0 + $0x8] sm:$0xff]
    %v64 = vlaneseq
    %v65 = vand.u32 %v64, 127
    %66 = vset.pattern.permute.xlu0 0
    %67 = vperm.xlu0 %66, %v62
    %v68 = vpop.permute.xlu0 %67
    %69 = vset.pattern.permute.xlu0 0
    %70 = vperm.xlu0 %69, %v63
    %v71 = vpop.permute.xlu0 %70
    %vm72 = vcmp.eq.s32.totalorder %v65, %v68
    %vm73 = vcmp.eq.s32.totalorder %v65, %v71
    %v74 = vsel %vm72, 1, 0
    %v75 = vsel %vm73, 1, 0
    %v76 = vcvt.s32.f32 %v74
    %v77 = vcvt.s32.f32 %v75
    %v78 = vpack.c.bf16 %v77, %v76
    %v79 = vld [vmem:[#allocation2] sm:$0xff]
    %v87 = vunpack.c.l.b16 %v55
    %v88 = vunpack.c.l.b16 %v56
    %v89 = vunpack.c.l.b16 %v57
    %v90 = vunpack.c.l.b16 %v58
    %v91 = vunpack.c.l.b16 %v59
    %v92 = vunpack.c.l.b16 %v60
    %v93 = vunpack.c.l.b16 %v61
    %v94 = vpack.c.b16 %v88, %v87
    %v95 = vpack.c.b16 %v90, %v89
    %v96 = vpack.c.b16 %v92, %v91
    %v97 = vpack.c.b16 %v93, %v93
    %vm101 = vcmask 408576
    %v103 = vsel %vm101, %v78, 0
    %vm105 = vcmask 1040384
    %v107 = vsel %vm105, %v97, 0
    %109 = vmatpush.bf16.msra.mxu0 0
    %110 = vmatpush.bf16.msra.mxu0 0
    %111 = vmatpush.bf16.msra.mxu0 0
    %112 = vmatpush.bf16.msra.mxu0 0
    %113 = vmatpush.bf16.msra.mxu0 %v107
    %114 = vmatpush.bf16.msra.mxu0 %v96
    %115 = vmatpush.bf16.msra.mxu0 %v95
    %116 = vmatpush.bf16.msra.mxu0 %v94
    %117 = vmatmul.bf16.gmra.mxu0 %v103
    %v118 = vpop.f32.mrf.mxu0
    %v119 = vadd.f32 %v79, %v118
    %v120 = vpop.f32.mrf.mxu0
    %v121 = vadd.f32 %v79, %v120
    %122 = vdwg.mxu0
    %v123 = vld [vmem:[#allocation2 + $0x10] sm:$0x1]
    %v124 = vld [vmem:[#allocation2 + $0x11] sm:$0x1]
    %vm125 = vcmask 261120
    %v126 = vsel %vm125, %v119, 0.0
    %127 = vadd.xlane.f32.xlu0 %v126
    %v128 = vpop.xlane.xlu0 %127
    %v129 = vsel %vm125, %v121, 0.0
    %130 = vadd.xlane.f32.xlu0 %v129
    %v131 = vpop.xlane.xlu0 %130
    %v132 = vrcp.pop 32.0
    %v133 = vmul.f32 32.0, %v132
    %v134 = vsub.f32 1.0, %v133
    %v135 = vmul.f32 %v132, %v134
    %v136 = vadd.f32 %v132, %v135
    %vm137 = vweird.f32 %v132
    %v138 = vsel %vm137, %v132, %v136
    %v139 = vmul.f32 %v128, %v138
    %v140 = vmul.f32 %v131, %v138
    %v141 = vsub.f32 %v119, %v139
    %v142 = vsub.f32 %v121, %v140
    %v143 = vmul.f32 %v141, %v141
    %v144 = vmul.f32 %v142, %v142
    %v145 = vsel %vm125, %v143, 0.0
    %146 = vadd.xlane.f32.xlu0 %v145
    %v147 = vpop.xlane.xlu0 %146
    %v148 = vsel %vm125, %v144, 0.0
    %149 = vadd.xlane.f32.xlu0 %v148
    %v150 = vpop.xlane.xlu0 %149
    %v151 = vmul.f32 %v147, %v138
    %v152 = vmul.f32 %v150, %v138
    %v153 = vadd.f32 %v151, 1e-12
    %v154 = vadd.f32 %v152, 1e-12
    %v155 = vrsqrt.pop %v153
    %v156 = vmul.f32 %v155, %v153
    %v157 = vmul.f32 %v156, %v155
    %v158 = vmul.f32 0.5, %v157
    %v159 = vsub.f32 1.5, %v158
    %v160 = vmul.f32 %v155, %v159
    %vm161 = vweird.f32 %v153
    %vm162 = vweird.f32 %v155
    %vm163 = vmor %vm161, %vm162
    %v164 = vsel %vm163, %v155, %v160
    %v165 = vrsqrt.pop %v154
    %v166 = vmul.f32 %v165, %v154
    %v167 = vmul.f32 %v166, %v165
    %v168 = vmul.f32 0.5, %v167
    %v169 = vsub.f32 1.5, %v168
    %v170 = vmul.f32 %v165, %v169
    %vm171 = vweird.f32 %v154
    %vm172 = vweird.f32 %v165
    %vm173 = vmor %vm171, %vm172
    %v174 = vsel %vm173, %v165, %v170
    %v175 = vmul.f32 %v141, %v164
    %v176 = vmul.f32 %v142, %v174
    %v177 = vperm.slane %v123, 0
    %v178 = vmul.f32 %v175, %v177
    %v179 = vmul.f32 %v176, %v177
    %v180 = vperm.slane %v124, 0
    %v181 = vadd.f32 %v178, %v180
    %v182 = vadd.f32 %v179, %v180
    %v183 = vld [vmem:[%s1] sm:$0x1]
    %v184 = vld [vmem:[%s1 + $0x1] sm:$0x1]
    %v185 = vsub.f32 1.0, %v183
    %v186 = vsub.f32 1.0, %v184
    %v187 = vmul.f32 %v185, -1e+09
    %v188 = vmul.f32 %v186, -1e+09
    %v189 = vld [vmem:[#allocation5] sm:$0xf]
    %v190 = vld [vmem:[#allocation5 + $0x4] sm:$0xf]
    %v191 = vld [vmem:[#allocation5 + $0x8] sm:$0xf]
    %v192 = vld [vmem:[#allocation5 + $0xc] sm:$0xf]
    %s193 = scalar_lea.vmem [#allocation5], 32
    %v194 = vld [vmem:[%s193] sm:$0xf]
    %v195 = vld [vmem:[%s193 + $0x4] sm:$0xf]
    %v196 = vld [vmem:[%s193 + $0x8] sm:$0xf]
    %v197 = vld [vmem:[%s193 + $0xc] sm:$0xf]
    %s198 = scalar_lea.vmem [#allocation5], 64
    %v199 = vld [vmem:[%s198] sm:$0xf]
    %v200 = vld [vmem:[%s198 + $0x4] sm:$0xf]
    %v201 = vld [vmem:[%s198 + $0x8] sm:$0xf]
    %v202 = vld [vmem:[%s198 + $0xc] sm:$0xf]
    %s203 = scalar_lea.vmem [#allocation5], 96
    %v204 = vld [vmem:[%s203] sm:$0xf]
    %v205 = vld [vmem:[%s203 + $0x4] sm:$0xf]
    %v206 = vld [vmem:[%s203 + $0x8] sm:$0xf]
    %v207 = vld [vmem:[%s203 + $0xc] sm:$0xf]
    %v208 = vld [vmem:[%s203 + $0x10] sm:$0xf]
    %v209 = vld [vmem:[%s203 + $0x14] sm:$0xf]
    %v210 = vld [vmem:[%s203 + $0x18] sm:$0xf]
    %v211 = vld [vmem:[%s203 + $0x1c] sm:$0xf]
    %v212 = vpack.c.bf16 %v182, %v181
    %v213 = vld [vmem:[%s3] sm:$0x1]
    %v214 = vperm.slane %v213, 0
    %v219 = vunpack.c.l.b16 %v189
    %v220 = vunpack.c.l.b16 %v190
    %v221 = vunpack.c.l.b16 %v191
    %v222 = vunpack.c.l.b16 %v192
    %v223 = vpack.c.b16 %v220, %v219
    %v224 = vpack.c.b16 %v222, %v221
    %v228 = vsel %vm125, %v212, 0
    %230 = vmatpush.bf16.msra.mxu0 0
    %231 = vmatpush.bf16.msra.mxu0 0
    %232 = vmatpush.bf16.msra.mxu0 0
    %233 = vmatpush.bf16.msra.mxu0 0
    %234 = vmatpush.bf16.msra.mxu0 0
    %235 = vmatpush.bf16.msra.mxu0 0
    %236 = vmatpush.bf16.msra.mxu0 %v224
    %237 = vmatpush.bf16.msra.mxu0 %v223
    %238 = vmatmul.bf16.gmra.mxu0 %v228
    %v239 = vpop.f32.mrf.mxu0
    %v240 = vadd.f32 %v214, %v239
    %v241 = vpop.f32.mrf.mxu0
    %v242 = vadd.f32 %v214, %v241
    %243 = vdwg.mxu0
    %v244 = vpack.c.bf16 %v240, %v240
    %v245 = vpack.c.bf16 %v242, %v242
    %v247 = vunpack.c.l.b16 %v244
    %v248 = vpack.c.b16 %v247, %v247
    %249 = vrot.lane.b32.xlu0 %v248, 96
    %v250 = vpop.permute.xlu0 %249
    %vm251 = vcmask 130048
    %v253 = vsel %vm251, %v244, 0
    %v256 = vsel %vm251, %v250, 0
    %258 = vmatpush.bf16.xpose.msra.mxu0 0
    %259 = vmatpush.bf16.xpose.msra.mxu0 0
    %260 = vmatpush.bf16.xpose.msra.mxu0 0
    %261 = vmatpush.bf16.xpose.msra.mxu0 0
    %262 = vmatpush.bf16.xpose.msra.mxu0 0
    %263 = vmatpush.bf16.xpose.msra.mxu0 0
    %264 = vmatpush.bf16.xpose.msra.mxu0 0
    %265 = vmatpush.bf16.xpose.msra.mxu0 %v256
    %266 = vmatmul.bf16.gmra.mxu0 %v253
    %v267 = vpop.f32.mrf.mxu0
    %v268 = vadd.f32 0.0, %v267
    %v269 = vpop.f32.mrf.mxu0
    %270 = vdwg.mxu0
    %v272 = vunpack.c.l.b16 %v245
    %v273 = vpack.c.b16 %v272, %v272
    %274 = vrot.lane.b32.xlu0 %v273, 96
    %v275 = vpop.permute.xlu0 %274
    %v277 = vsel %vm251, %v245, 0
    %v280 = vsel %vm251, %v275, 0
    %282 = vmatpush.bf16.xpose.msra.mxu0 0
    %283 = vmatpush.bf16.xpose.msra.mxu0 0
    %284 = vmatpush.bf16.xpose.msra.mxu0 0
    %285 = vmatpush.bf16.xpose.msra.mxu0 0
    %286 = vmatpush.bf16.xpose.msra.mxu0 0
    %287 = vmatpush.bf16.xpose.msra.mxu0 0
    %288 = vmatpush.bf16.xpose.msra.mxu0 0
    %289 = vmatpush.bf16.xpose.msra.mxu0 %v280
    %290 = vmatmul.bf16.gmra.mxu0 %v277
    %v291 = vpop.f32.mrf.mxu0
    %v292 = vadd.f32 0.0, %v291
    %v293 = vpop.f32.mrf.mxu0
    %294 = vdwg.mxu0
    %v295 = vmul.f32 %v268, 0.25
    %v296 = vmul.f32 %v292, 0.25
    %v299 = vperm.slane %v187, 0
    %v300 = vperm.slane %v188, 0
    %v303 = vadd.f32 %v295, %v299
    %v304 = vadd.f32 %v296, %v300
    %vm305 = vcmask 64512
    %v306 = vsel %vm305, %v303, -inf
    %307 = vmax.xlane.f32.xlu0 %v306
    %v308 = vpop.xlane.xlu0 %307
    %v309 = vsel %vm305, %v304, -inf
    %310 = vmax.xlane.f32.xlu0 %v309
    %v311 = vpop.xlane.xlu0 %310
    %v312 = vsub.f32 %v303, %v308
    %v313 = vsub.f32 %v304, %v311
    %v314 = vmul.f32 %v312, 1.442695
    %v315 = vpow.pop %v314
    %v316 = vmul.f32 %v313, 1.442695
    %v317 = vpow.pop %v316
    %v318 = vsel %vm305, %v315, 0.0
    %319 = vadd.xlane.f32.xlu0 %v318
    %v320 = vpop.xlane.xlu0 %319
    %v321 = vsel %vm305, %v317, 0.0
    %322 = vadd.xlane.f32.xlu0 %v321
    %v323 = vpop.xlane.xlu0 %322
    %v324 = vrcp.pop %v320
    %v325 = vrcp.pop %v323
    %v326 = vmul.f32 %v315, %v324
    %v327 = vmul.f32 %v317, %v325
    %v328 = vpack.c.bf16 %v326, %v326
    %v329 = vpack.c.bf16 %v327, %v327
    %330 = vrot.lane.b32.xlu0 %v248, 64
    %v331 = vpop.permute.xlu0 %330
    %v333 = vsel %vm305, %v328, 0
    %vm335 = vcmask 1043456
    %v337 = vsel %vm335, %v331, 0
    %339 = vmatpush.bf16.msra.mxu0 0
    %340 = vmatpush.bf16.msra.mxu0 0
    %341 = vmatpush.bf16.msra.mxu0 0
    %342 = vmatpush.bf16.msra.mxu0 0
    %343 = vmatpush.bf16.msra.mxu0 0
    %344 = vmatpush.bf16.msra.mxu0 0
    %345 = vmatpush.bf16.msra.mxu0 0
    %346 = vmatpush.bf16.msra.mxu0 %v337
    %347 = vmatmul.bf16.gmra.mxu0 %v333
    %v348 = vpop.f32.mrf.mxu0
    %v349 = vadd.f32 0.0, %v348
    %v350 = vpop.f32.mrf.mxu0
    %351 = vdwg.mxu0
    %352 = vrot.lane.b32.xlu0 %v273, 64
    %v353 = vpop.permute.xlu0 %352
    %v355 = vsel %vm305, %v329, 0
    %v358 = vsel %vm335, %v353, 0
    %360 = vmatpush.bf16.msra.mxu0 0
    %361 = vmatpush.bf16.msra.mxu0 0
    %362 = vmatpush.bf16.msra.mxu0 0
    %363 = vmatpush.bf16.msra.mxu0 0
    %364 = vmatpush.bf16.msra.mxu0 0
    %365 = vmatpush.bf16.msra.mxu0 0
    %366 = vmatpush.bf16.msra.mxu0 0
    %367 = vmatpush.bf16.msra.mxu0 %v358
    %368 = vmatmul.bf16.gmra.mxu0 %v355
    %v369 = vpop.f32.mrf.mxu0
    %v370 = vadd.f32 0.0, %v369
    %v371 = vpop.f32.mrf.mxu0
    %372 = vdwg.mxu0
    %373 = vrot.lane.b32.xlu0 %v248, 112
    %v374 = vpop.permute.xlu0 %373
    %375 = vrot.lane.b32.xlu0 %v248, 80
    %v376 = vpop.permute.xlu0 %375
    %v378 = vsel %vm251, %v374, 0
    %v381 = vsel %vm251, %v376, 0
    %383 = vmatpush.bf16.xpose.msra.mxu0 0
    %384 = vmatpush.bf16.xpose.msra.mxu0 0
    %385 = vmatpush.bf16.xpose.msra.mxu0 0
    %386 = vmatpush.bf16.xpose.msra.mxu0 0
    %387 = vmatpush.bf16.xpose.msra.mxu0 0
    %388 = vmatpush.bf16.xpose.msra.mxu0 0
    %389 = vmatpush.bf16.xpose.msra.mxu0 0
    %390 = vmatpush.bf16.xpose.msra.mxu0 %v381
    %391 = vmatmul.bf16.gmra.mxu0 %v378
    %v392 = vpop.f32.mrf.mxu0
    %v393 = vadd.f32 0.0, %v392
    %v394 = vpop.f32.mrf.mxu0
    %395 = vdwg.mxu0
    %396 = vrot.lane.b32.xlu0 %v273, 112
    %v397 = vpop.permute.xlu0 %396
    %398 = vrot.lane.b32.xlu0 %v273, 80
    %v399 = vpop.permute.xlu0 %398
    %v401 = vsel %vm251, %v397, 0
    %v404 = vsel %vm251, %v399, 0
    %406 = vmatpush.bf16.xpose.msra.mxu0 0
    %407 = vmatpush.bf16.xpose.msra.mxu0 0
    %408 = vmatpush.bf16.xpose.msra.mxu0 0
    %409 = vmatpush.bf16.xpose.msra.mxu0 0
    %410 = vmatpush.bf16.xpose.msra.mxu0 0
    %411 = vmatpush.bf16.xpose.msra.mxu0 0
    %412 = vmatpush.bf16.xpose.msra.mxu0 0
    %413 = vmatpush.bf16.xpose.msra.mxu0 %v404
    %414 = vmatmul.bf16.gmra.mxu0 %v401
    %v415 = vpop.f32.mrf.mxu0
    %v416 = vadd.f32 0.0, %v415
    %v417 = vpop.f32.mrf.mxu0
    %418 = vdwg.mxu0
    %v419 = vmul.f32 %v393, 0.25
    %v420 = vmul.f32 %v416, 0.25
    %v421 = vadd.f32 %v419, %v299
    %v422 = vadd.f32 %v420, %v300
    %v423 = vsel %vm305, %v421, -inf
    %424 = vmax.xlane.f32.xlu0 %v423
    %v425 = vpop.xlane.xlu0 %424
    %v426 = vsel %vm305, %v422, -inf
    %427 = vmax.xlane.f32.xlu0 %v426
    %v428 = vpop.xlane.xlu0 %427
    %v429 = vsub.f32 %v421, %v425
    %v430 = vsub.f32 %v422, %v428
    %v431 = vmul.f32 %v429, 1.442695
    %v432 = vpow.pop %v431
    %v433 = vmul.f32 %v430, 1.442695
    %v434 = vpow.pop %v433
    %v435 = vsel %vm305, %v432, 0.0
    %436 = vadd.xlane.f32.xlu0 %v435
    %v437 = vpop.xlane.xlu0 %436
    %v438 = vsel %vm305, %v434, 0.0
    %439 = vadd.xlane.f32.xlu0 %v438
    %v440 = vpop.xlane.xlu0 %439
    %v441 = vrcp.pop %v437
    %v442 = vrcp.pop %v440
    %v443 = vmul.f32 %v432, %v441
    %v444 = vmul.f32 %v434, %v442
    %v445 = vpack.c.bf16 %v443, %v443
    %v446 = vpack.c.bf16 %v444, %v444
    %447 = vrot.lane.b32.xlu0 %v248, 48
    %v448 = vpop.permute.xlu0 %447
    %v450 = vsel %vm305, %v445, 0
    %v453 = vsel %vm335, %v448, 0
    %455 = vmatpush.bf16.msra.mxu0 0
    %456 = vmatpush.bf16.msra.mxu0 0
    %457 = vmatpush.bf16.msra.mxu0 0
    %458 = vmatpush.bf16.msra.mxu0 0
    %459 = vmatpush.bf16.msra.mxu0 0
    %460 = vmatpush.bf16.msra.mxu0 0
    %461 = vmatpush.bf16.msra.mxu0 0
    %462 = vmatpush.bf16.msra.mxu0 %v453
    %463 = vmatmul.bf16.gmra.mxu0 %v450
    %v464 = vpop.f32.mrf.mxu0
    %v465 = vadd.f32 0.0, %v464
    %v466 = vpop.f32.mrf.mxu0
    %467 = vdwg.mxu0
    %468 = vrot.lane.b32.xlu0 %v273, 48
    %v469 = vpop.permute.xlu0 %468
    %v471 = vsel %vm305, %v446, 0
    %v474 = vsel %vm335, %v469, 0
    %476 = vmatpush.bf16.msra.mxu0 0
    %477 = vmatpush.bf16.msra.mxu0 0
    %478 = vmatpush.bf16.msra.mxu0 0
    %479 = vmatpush.bf16.msra.mxu0 0
    %480 = vmatpush.bf16.msra.mxu0 0
    %481 = vmatpush.bf16.msra.mxu0 0
    %482 = vmatpush.bf16.msra.mxu0 0
    %483 = vmatpush.bf16.msra.mxu0 %v474
    %484 = vmatmul.bf16.gmra.mxu0 %v471
    %v485 = vpop.f32.mrf.mxu0
    %v486 = vadd.f32 0.0, %v485
    %v487 = vpop.f32.mrf.mxu0
    %488 = vdwg.mxu0
    %491 = vrot.lane.b32.xlu0 %v465, 16
    %v492 = vpop.permute.xlu0 %491
    %493 = vrot.lane.b32.xlu0 %v486, 16
    %v494 = vpop.permute.xlu0 %493
    %v497 = vsel %vm251, %v349, %v492
    %v498 = vsel %vm251, %v370, %v494
    %v499 = vpack.c.bf16 %v498, %v497
    %v500 = vld [vmem:[%s3 + $0x1] sm:$0x1]
    %v501 = vperm.slane %v500, 0
    %v506 = vunpack.c.l.b16 %v194
    %v507 = vunpack.c.l.b16 %v195
    %v508 = vunpack.c.l.b16 %v196
    %v509 = vunpack.c.l.b16 %v197
    %v510 = vpack.c.b16 %v507, %v506
    %v511 = vpack.c.b16 %v509, %v508
    %v515 = vsel %vm125, %v499, 0
    %517 = vmatpush.bf16.msra.mxu0 0
    %518 = vmatpush.bf16.msra.mxu0 0
    %519 = vmatpush.bf16.msra.mxu0 0
    %520 = vmatpush.bf16.msra.mxu0 0
    %521 = vmatpush.bf16.msra.mxu0 0
    %522 = vmatpush.bf16.msra.mxu0 0
    %523 = vmatpush.bf16.msra.mxu0 %v511
    %524 = vmatpush.bf16.msra.mxu0 %v510
    %525 = vmatmul.bf16.gmra.mxu0 %v515
    %v526 = vpop.f32.mrf.mxu0
    %v527 = vadd.f32 %v501, %v526
    %v528 = vpop.f32.mrf.mxu0
    %v529 = vadd.f32 %v501, %v528
    %530 = vdwg.mxu0
    %v531 = vadd.f32 %v181, %v527
    %v532 = vadd.f32 %v182, %v529
    %v533 = vld [vmem:[%s3 + $0x2] sm:$0x1]
    %v534 = vld [vmem:[%s3 + $0x3] sm:$0x1]
    %v535 = vsel %vm125, %v531, 0.0
    %536 = vadd.xlane.f32.xlu0 %v535
    %v537 = vpop.xlane.xlu0 %536
    %v538 = vsel %vm125, %v532, 0.0
    %539 = vadd.xlane.f32.xlu0 %v538
    %v540 = vpop.xlane.xlu0 %539
    %v541 = vmul.f32 %v537, %v138
    %v542 = vmul.f32 %v540, %v138
    %v543 = vsub.f32 %v531, %v541
    %v544 = vsub.f32 %v532, %v542
    %v545 = vmul.f32 %v543, %v543
    %v546 = vmul.f32 %v544, %v544
    %v547 = vsel %vm125, %v545, 0.0
    %548 = vadd.xlane.f32.xlu0 %v547
    %v549 = vpop.xlane.xlu0 %548
    %v550 = vsel %vm125, %v546, 0.0
    %551 = vadd.xlane.f32.xlu0 %v550
    %v552 = vpop.xlane.xlu0 %551
    %v553 = vmul.f32 %v549, %v138
    %v554 = vmul.f32 %v552, %v138
    %v555 = vadd.f32 %v553, 1e-12
    %v556 = vadd.f32 %v554, 1e-12
    %v557 = vrsqrt.pop %v555
    %v558 = vmul.f32 %v557, %v555
    %v559 = vmul.f32 %v558, %v557
    %v560 = vmul.f32 0.5, %v559
    %v561 = vsub.f32 1.5, %v560
    %v562 = vmul.f32 %v557, %v561
    %vm563 = vweird.f32 %v555
    %vm564 = vweird.f32 %v557
    %vm565 = vmor %vm563, %vm564
    %v566 = vsel %vm565, %v557, %v562
    %v567 = vrsqrt.pop %v556
    %v568 = vmul.f32 %v567, %v556
    %v569 = vmul.f32 %v568, %v567
    %v570 = vmul.f32 0.5, %v569
    %v571 = vsub.f32 1.5, %v570
    %v572 = vmul.f32 %v567, %v571
    %vm573 = vweird.f32 %v556
    %vm574 = vweird.f32 %v567
    %vm575 = vmor %vm573, %vm574
    %v576 = vsel %vm575, %v567, %v572
    %v577 = vmul.f32 %v543, %v566
    %v578 = vmul.f32 %v544, %v576
    %v579 = vperm.slane %v533, 0
    %v580 = vmul.f32 %v577, %v579
    %v581 = vmul.f32 %v578, %v579
    %v582 = vperm.slane %v534, 0
    %v583 = vadd.f32 %v580, %v582
    %v584 = vadd.f32 %v581, %v582
    %v585 = vpack.c.bf16 %v584, %v583
    %v586 = vld [vmem:[%s3 + $0x4] sm:$0x1]
    %v587 = vperm.slane %v586, 0
    %v592 = vunpack.c.l.b16 %v199
    %v593 = vunpack.c.l.b16 %v200
    %v594 = vunpack.c.l.b16 %v201
    %v595 = vunpack.c.l.b16 %v202
    %v596 = vpack.c.b16 %v593, %v592
    %v597 = vpack.c.b16 %v595, %v594
    %v601 = vsel %vm125, %v585, 0
    %603 = vmatpush.bf16.msra.mxu0 0
    %604 = vmatpush.bf16.msra.mxu0 0
    %605 = vmatpush.bf16.msra.mxu0 0
    %606 = vmatpush.bf16.msra.mxu0 0
    %607 = vmatpush.bf16.msra.mxu0 0
    %608 = vmatpush.bf16.msra.mxu0 0
    %609 = vmatpush.bf16.msra.mxu0 %v597
    %610 = vmatpush.bf16.msra.mxu0 %v596
    %611 = vmatmul.bf16.gmra.mxu0 %v601
    %v612 = vpop.f32.mrf.mxu0
    %v613 = vadd.f32 %v587, %v612
    %v614 = vpop.f32.mrf.mxu0
    %v615 = vadd.f32 %v587, %v614
    %616 = vdwg.mxu0
    %v617 = vmul.f32 %v613, %v613
    %v618 = vmul.f32 %v615, %v615
    %v619 = vmul.f32 %v613, %v617
    %v620 = vmul.f32 %v615, %v618
    %v621 = vmul.f32 %v619, 0.044715
    %v622 = vmul.f32 %v620, 0.044715
    %v623 = vadd.f32 %v613, %v621
    %v624 = vadd.f32 %v615, %v622
    %v625 = vmul.f32 %v623, 0.7978846
    %v626 = vmul.f32 %v624, 0.7978846
    %v627 = vtanh.pop %v625
    %v628 = vtanh.pop %v626
    %v629 = vadd.f32 %v627, 1.0
    %v630 = vadd.f32 %v628, 1.0
    %v631 = vmul.f32 %v629, 0.5
    %v632 = vmul.f32 %v630, 0.5
    %v633 = vmul.f32 %v613, %v631
    %v634 = vmul.f32 %v615, %v632
    %v635 = vpack.c.bf16 %v634, %v633
    %v636 = vld [vmem:[%s3 + $0x5] sm:$0x1]
    %v637 = vperm.slane %v636, 0
    %v646 = vunpack.c.l.b16 %v204
    %v647 = vunpack.c.l.b16 %v205
    %v648 = vunpack.c.l.b16 %v206
    %v649 = vunpack.c.l.b16 %v207
    %v650 = vunpack.c.l.b16 %v208
    %v651 = vunpack.c.l.b16 %v209
    %v652 = vunpack.c.l.b16 %v210
    %v653 = vunpack.c.l.b16 %v211
    %v654 = vpack.c.b16 %v647, %v646
    %v655 = vpack.c.b16 %v649, %v648
    %v656 = vpack.c.b16 %v651, %v650
    %v657 = vpack.c.b16 %v653, %v652
    %vm662 = vcmask 523264
    %v664 = vsel %vm662, %v635, 0
    %666 = vmatpush.bf16.msra.mxu0 0
    %667 = vmatpush.bf16.msra.mxu0 0
    %668 = vmatpush.bf16.msra.mxu0 0
    %669 = vmatpush.bf16.msra.mxu0 0
    %670 = vmatpush.bf16.msra.mxu0 %v657
    %671 = vmatpush.bf16.msra.mxu0 %v656
    %672 = vmatpush.bf16.msra.mxu0 %v655
    %673 = vmatpush.bf16.msra.mxu0 %v654
    %674 = vmatmul.bf16.gmra.mxu0 %v664
    %v675 = vpop.f32.mrf.mxu0
    %v676 = vadd.f32 %v637, %v675
    %v677 = vpop.f32.mrf.mxu0
    %v678 = vadd.f32 %v637, %v677
    %679 = vdwg.mxu0
    %v680 = vadd.f32 %v583, %v676
    %v681 = vadd.f32 %v584, %v678
    %v682 = vld [vmem:[%s3 + $0x6] sm:$0x1]
    %v683 = vld [vmem:[%s3 + $0x7] sm:$0x1]
    %v684 = vsel %vm125, %v680, 0.0
    %685 = vadd.xlane.f32.xlu0 %v684
    %v686 = vpop.xlane.xlu0 %685
    %v687 = vsel %vm125, %v681, 0.0
    %688 = vadd.xlane.f32.xlu0 %v687
    %v689 = vpop.xlane.xlu0 %688
    %v690 = vmul.f32 %v686, %v138
    %v691 = vmul.f32 %v689, %v138
    %v692 = vsub.f32 %v680, %v690
    %v693 = vsub.f32 %v681, %v691
    %v694 = vmul.f32 %v692, %v692
    %v695 = vmul.f32 %v693, %v693
    %v696 = vsel %vm125, %v694, 0.0
    %697 = vadd.xlane.f32.xlu0 %v696
    %v698 = vpop.xlane.xlu0 %697
    %v699 = vsel %vm125, %v695, 0.0
    %700 = vadd.xlane.f32.xlu0 %v699
    %v701 = vpop.xlane.xlu0 %700
    %v702 = vmul.f32 %v698, %v138
    %v703 = vmul.f32 %v701, %v138
    %v704 = vadd.f32 %v702, 1e-12
    %v705 = vadd.f32 %v703, 1e-12
    %v706 = vrsqrt.pop %v704
    %v707 = vmul.f32 %v706, %v704
    %v708 = vmul.f32 %v707, %v706
    %v709 = vmul.f32 0.5, %v708
    %v710 = vsub.f32 1.5, %v709
    %v711 = vmul.f32 %v706, %v710
    %vm712 = vweird.f32 %v704
    %vm713 = vweird.f32 %v706
    %vm714 = vmor %vm712, %vm713
    %v715 = vsel %vm714, %v706, %v711
    %v716 = vrsqrt.pop %v705
    %v717 = vmul.f32 %v716, %v705
    %v718 = vmul.f32 %v717, %v716
    %v719 = vmul.f32 0.5, %v718
    %v720 = vsub.f32 1.5, %v719
    %v721 = vmul.f32 %v716, %v720
    %vm722 = vweird.f32 %v705
    %vm723 = vweird.f32 %v716
    %vm724 = vmor %vm722, %vm723
    %v725 = vsel %vm724, %v716, %v721
    %v726 = vmul.f32 %v692, %v715
    %v727 = vmul.f32 %v693, %v725
    %v728 = vperm.slane %v682, 0
    %v729 = vmul.f32 %v726, %v728
    %v730 = vmul.f32 %v727, %v728
    %v731 = vperm.slane %v683, 0
    %v732 = vadd.f32 %v729, %v731
    %v733 = vadd.f32 %v730, %v731
    %s734 = scalar_lea.vmem [#allocation5], 128
    %v735 = vld [vmem:[%s734] sm:$0xf]
    %v736 = vld [vmem:[%s734 + $0x4] sm:$0xf]
    %v737 = vld [vmem:[%s734 + $0x8] sm:$0xf]
    %v738 = vld [vmem:[%s734 + $0xc] sm:$0xf]
    %s739 = scalar_lea.vmem [#allocation5], 160
    %v740 = vld [vmem:[%s739] sm:$0xf]
    %v741 = vld [vmem:[%s739 + $0x4] sm:$0xf]
    %v742 = vld [vmem:[%s739 + $0x8] sm:$0xf]
    %v743 = vld [vmem:[%s739 + $0xc] sm:$0xf]
    %s744 = scalar_lea.vmem [#allocation5], 192
    %v745 = vld [vmem:[%s744] sm:$0xf]
    %v746 = vld [vmem:[%s744 + $0x4] sm:$0xf]
    %v747 = vld [vmem:[%s744 + $0x8] sm:$0xf]
    %v748 = vld [vmem:[%s744 + $0xc] sm:$0xf]
    %s749 = scalar_lea.vmem [#allocation5], 224
    %v750 = vld [vmem:[%s749] sm:$0xf]
    %v751 = vld [vmem:[%s749 + $0x4] sm:$0xf]
    %v752 = vld [vmem:[%s749 + $0x8] sm:$0xf]
    %v753 = vld [vmem:[%s749 + $0xc] sm:$0xf]
    %v754 = vld [vmem:[%s749 + $0x10] sm:$0xf]
    %v755 = vld [vmem:[%s749 + $0x14] sm:$0xf]
    %v756 = vld [vmem:[%s749 + $0x18] sm:$0xf]
    %v757 = vld [vmem:[%s749 + $0x1c] sm:$0xf]
    %v758 = vpack.c.bf16 %v733, %v732
    %s759 = scalar_lea.vmem %s3, 8
    %v760 = vld [vmem:[%s759] sm:$0x1]
    %v761 = vperm.slane %v760, 0
    %v766 = vunpack.c.l.b16 %v735
    %v767 = vunpack.c.l.b16 %v736
    %v768 = vunpack.c.l.b16 %v737
    %v769 = vunpack.c.l.b16 %v738
    %v770 = vpack.c.b16 %v767, %v766
    %v771 = vpack.c.b16 %v769, %v768
    %v775 = vsel %vm125, %v758, 0
    %777 = vmatpush.bf16.msra.mxu0 0
    %778 = vmatpush.bf16.msra.mxu0 0
    %779 = vmatpush.bf16.msra.mxu0 0
    %780 = vmatpush.bf16.msra.mxu0 0
    %781 = vmatpush.bf16.msra.mxu0 0
    %782 = vmatpush.bf16.msra.mxu0 0
    %783 = vmatpush.bf16.msra.mxu0 %v771
    %784 = vmatpush.bf16.msra.mxu0 %v770
    %785 = vmatmul.bf16.gmra.mxu0 %v775
    %v786 = vpop.f32.mrf.mxu0
    %v787 = vadd.f32 %v761, %v786
    %v788 = vpop.f32.mrf.mxu0
    %v789 = vadd.f32 %v761, %v788
    %790 = vdwg.mxu0
    %v791 = vpack.c.bf16 %v787, %v787
    %v792 = vpack.c.bf16 %v789, %v789
    %v794 = vunpack.c.l.b16 %v791
    %v795 = vpack.c.b16 %v794, %v794
    %796 = vrot.lane.b32.xlu0 %v795, 96
    %v797 = vpop.permute.xlu0 %796
    %v799 = vsel %vm251, %v791, 0
    %v802 = vsel %vm251, %v797, 0
    %804 = vmatpush.bf16.xpose.msra.mxu0 0
    %805 = vmatpush.bf16.xpose.msra.mxu0 0
    %806 = vmatpush.bf16.xpose.msra.mxu0 0
    %807 = vmatpush.bf16.xpose.msra.mxu0 0
    %808 = vmatpush.bf16.xpose.msra.mxu0 0
    %809 = vmatpush.bf16.xpose.msra.mxu0 0
    %810 = vmatpush.bf16.xpose.msra.mxu0 0
    %811 = vmatpush.bf16.xpose.msra.mxu0 %v802
    %812 = vmatmul.bf16.gmra.mxu0 %v799
    %v813 = vpop.f32.mrf.mxu0
    %v814 = vadd.f32 0.0, %v813
    %v815 = vpop.f32.mrf.mxu0
    %816 = vdwg.mxu0
    %v818 = vunpack.c.l.b16 %v792
    %v819 = vpack.c.b16 %v818, %v818
    %820 = vrot.lane.b32.xlu0 %v819, 96
    %v821 = vpop.permute.xlu0 %820
    %v823 = vsel %vm251, %v792, 0
    %v826 = vsel %vm251, %v821, 0
    %828 = vmatpush.bf16.xpose.msra.mxu0 0
    %829 = vmatpush.bf16.xpose.msra.mxu0 0
    %830 = vmatpush.bf16.xpose.msra.mxu0 0
    %831 = vmatpush.bf16.xpose.msra.mxu0 0
    %832 = vmatpush.bf16.xpose.msra.mxu0 0
    %833 = vmatpush.bf16.xpose.msra.mxu0 0
    %834 = vmatpush.bf16.xpose.msra.mxu0 0
    %835 = vmatpush.bf16.xpose.msra.mxu0 %v826
    %836 = vmatmul.bf16.gmra.mxu0 %v823
    %v837 = vpop.f32.mrf.mxu0
    %v838 = vadd.f32 0.0, %v837
    %v839 = vpop.f32.mrf.mxu0
    %840 = vdwg.mxu0
    %v841 = vmul.f32 %v814, 0.25
    %v842 = vmul.f32 %v838, 0.25
    %v843 = vadd.f32 %v841, %v299
    %v844 = vadd.f32 %v842, %v300
    %v845 = vsel %vm305, %v843, -inf
    %846 = vmax.xlane.f32.xlu0 %v845
    %v847 = vpop.xlane.xlu0 %846
    %v848 = vsel %vm305, %v844, -inf
    %849 = vmax.xlane.f32.xlu0 %v848
    %v850 = vpop.xlane.xlu0 %849
    %v851 = vsub.f32 %v843, %v847
    %v852 = vsub.f32 %v844, %v850
    %v853 = vmul.f32 %v851, 1.442695
    %v854 = vpow.pop %v853
    %v855 = vmul.f32 %v852, 1.442695
    %v856 = vpow.pop %v855
    %v857 = vsel %vm305, %v854, 0.0
    %858 = vadd.xlane.f32.xlu0 %v857
    %v859 = vpop.xlane.xlu0 %858
    %v860 = vsel %vm305, %v856, 0.0
    %861 = vadd.xlane.f32.xlu0 %v860
    %v862 = vpop.xlane.xlu0 %861
    %v863 = vrcp.pop %v859
    %v864 = vrcp.pop %v862
    %v865 = vmul.f32 %v854, %v863
    %v866 = vmul.f32 %v856, %v864
    %v867 = vpack.c.bf16 %v865, %v865
    %v868 = vpack.c.bf16 %v866, %v866
    %869 = vrot.lane.b32.xlu0 %v795, 64
    %v870 = vpop.permute.xlu0 %869
    %v872 = vsel %vm305, %v867, 0
    %v875 = vsel %vm335, %v870, 0
    %877 = vmatpush.bf16.msra.mxu0 0
    %878 = vmatpush.bf16.msra.mxu0 0
    %879 = vmatpush.bf16.msra.mxu0 0
    %880 = vmatpush.bf16.msra.mxu0 0
    %881 = vmatpush.bf16.msra.mxu0 0
    %882 = vmatpush.bf16.msra.mxu0 0
    %883 = vmatpush.bf16.msra.mxu0 0
    %884 = vmatpush.bf16.msra.mxu0 %v875
    %885 = vmatmul.bf16.gmra.mxu0 %v872
    %v886 = vpop.f32.mrf.mxu0
    %v887 = vadd.f32 0.0, %v886
    %v888 = vpop.f32.mrf.mxu0
    %889 = vdwg.mxu0
    %890 = vrot.lane.b32.xlu0 %v819, 64
    %v891 = vpop.permute.xlu0 %890
    %v893 = vsel %vm305, %v868, 0
    %v896 = vsel %vm335, %v891, 0
    %898 = vmatpush.bf16.msra.mxu0 0
    %899 = vmatpush.bf16.msra.mxu0 0
    %900 = vmatpush.bf16.msra.mxu0 0
    %901 = vmatpush.bf16.msra.mxu0 0
    %902 = vmatpush.bf16.msra.mxu0 0
    %903 = vmatpush.bf16.msra.mxu0 0
    %904 = vmatpush.bf16.msra.mxu0 0
    %905 = vmatpush.bf16.msra.mxu0 %v896
    %906 = vmatmul.bf16.gmra.mxu0 %v893
    %v907 = vpop.f32.mrf.mxu0
    %v908 = vadd.f32 0.0, %v907
    %v909 = vpop.f32.mrf.mxu0
    %910 = vdwg.mxu0
    %911 = vrot.lane.b32.xlu0 %v795, 112
    %v912 = vpop.permute.xlu0 %911
    %913 = vrot.lane.b32.xlu0 %v795, 80
    %v914 = vpop.permute.xlu0 %913
    %v916 = vsel %vm251, %v912, 0
    %v919 = vsel %vm251, %v914, 0
    %921 = vmatpush.bf16.xpose.msra.mxu0 0
    %922 = vmatpush.bf16.xpose.msra.mxu0 0
    %923 = vmatpush.bf16.xpose.msra.mxu0 0
    %924 = vmatpush.bf16.xpose.msra.mxu0 0
    %925 = vmatpush.bf16.xpose.msra.mxu0 0
    %926 = vmatpush.bf16.xpose.msra.mxu0 0
    %927 = vmatpush.bf16.xpose.msra.mxu0 0
    %928 = vmatpush.bf16.xpose.msra.mxu0 %v919
    %929 = vmatmul.bf16.gmra.mxu0 %v916
    %v930 = vpop.f32.mrf.mxu0
    %v931 = vadd.f32 0.0, %v930
    %v932 = vpop.f32.mrf.mxu0
    %933 = vdwg.mxu0
    %934 = vrot.lane.b32.xlu0 %v819, 112
    %v935 = vpop.permute.xlu0 %934
    %936 = vrot.lane.b32.xlu0 %v819, 80
    %v937 = vpop.permute.xlu0 %936
    %v939 = vsel %vm251, %v935, 0
    %v942 = vsel %vm251, %v937, 0
    %944 = vmatpush.bf16.xpose.msra.mxu0 0
    %945 = vmatpush.bf16.xpose.msra.mxu0 0
    %946 = vmatpush.bf16.xpose.msra.mxu0 0
    %947 = vmatpush.bf16.xpose.msra.mxu0 0
    %948 = vmatpush.bf16.xpose.msra.mxu0 0
    %949 = vmatpush.bf16.xpose.msra.mxu0 0
    %950 = vmatpush.bf16.xpose.msra.mxu0 0
    %951 = vmatpush.bf16.xpose.msra.mxu0 %v942
    %952 = vmatmul.bf16.gmra.mxu0 %v939
    %v953 = vpop.f32.mrf.mxu0
    %v954 = vadd.f32 0.0, %v953
    %v955 = vpop.f32.mrf.mxu0
    %956 = vdwg.mxu0
    %v957 = vmul.f32 %v931, 0.25
    %v958 = vmul.f32 %v954, 0.25
    %v959 = vadd.f32 %v957, %v299
    %v960 = vadd.f32 %v958, %v300
    %v961 = vsel %vm305, %v959, -inf
    %962 = vmax.xlane.f32.xlu0 %v961
    %v963 = vpop.xlane.xlu0 %962
    %v964 = vsel %vm305, %v960, -inf
    %965 = vmax.xlane.f32.xlu0 %v964
    %v966 = vpop.xlane.xlu0 %965
    %v967 = vsub.f32 %v959, %v963
    %v968 = vsub.f32 %v960, %v966
    %v969 = vmul.f32 %v967, 1.442695
    %v970 = vpow.pop %v969
    %v971 = vmul.f32 %v968, 1.442695
    %v972 = vpow.pop %v971
    %v973 = vsel %vm305, %v970, 0.0
    %974 = vadd.xlane.f32.xlu0 %v973
    %v975 = vpop.xlane.xlu0 %974
    %v976 = vsel %vm305, %v972, 0.0
    %977 = vadd.xlane.f32.xlu0 %v976
    %v978 = vpop.xlane.xlu0 %977
    %v979 = vrcp.pop %v975
    %v980 = vrcp.pop %v978
    %v981 = vmul.f32 %v970, %v979
    %v982 = vmul.f32 %v972, %v980
    %v983 = vpack.c.bf16 %v981, %v981
    %v984 = vpack.c.bf16 %v982, %v982
    %985 = vrot.lane.b32.xlu0 %v795, 48
    %v986 = vpop.permute.xlu0 %985
    %v988 = vsel %vm305, %v983, 0
    %v991 = vsel %vm335, %v986, 0
    %993 = vmatpush.bf16.msra.mxu0 0
    %994 = vmatpush.bf16.msra.mxu0 0
    %995 = vmatpush.bf16.msra.mxu0 0
    %996 = vmatpush.bf16.msra.mxu0 0
    %997 = vmatpush.bf16.msra.mxu0 0
    %998 = vmatpush.bf16.msra.mxu0 0
    %999 = vmatpush.bf16.msra.mxu0 0
    %1000 = vmatpush.bf16.msra.mxu0 %v991
    %1001 = vmatmul.bf16.gmra.mxu0 %v988
    %v1002 = vpop.f32.mrf.mxu0
    %v1003 = vadd.f32 0.0, %v1002
    %v1004 = vpop.f32.mrf.mxu0
    %1005 = vdwg.mxu0
    %1006 = vrot.lane.b32.xlu0 %v819, 48
    %v1007 = vpop.permute.xlu0 %1006
    %v1009 = vsel %vm305, %v984, 0
    %v1012 = vsel %vm335, %v1007, 0
    %1014 = vmatpush.bf16.msra.mxu0 0
    %1015 = vmatpush.bf16.msra.mxu0 0
    %1016 = vmatpush.bf16.msra.mxu0 0
    %1017 = vmatpush.bf16.msra.mxu0 0
    %1018 = vmatpush.bf16.msra.mxu0 0
    %1019 = vmatpush.bf16.msra.mxu0 0
    %1020 = vmatpush.bf16.msra.mxu0 0
    %1021 = vmatpush.bf16.msra.mxu0 %v1012
    %1022 = vmatmul.bf16.gmra.mxu0 %v1009
    %v1023 = vpop.f32.mrf.mxu0
    %v1024 = vadd.f32 0.0, %v1023
    %v1025 = vpop.f32.mrf.mxu0
    %1026 = vdwg.mxu0
    %1029 = vrot.lane.b32.xlu0 %v1003, 16
    %v1030 = vpop.permute.xlu0 %1029
    %1031 = vrot.lane.b32.xlu0 %v1024, 16
    %v1032 = vpop.permute.xlu0 %1031
    %v1035 = vsel %vm251, %v887, %v1030
    %v1036 = vsel %vm251, %v908, %v1032
    %v1037 = vpack.c.bf16 %v1036, %v1035
    %v1038 = vld [vmem:[%s759 + $0x1] sm:$0x1]
    %v1039 = vperm.slane %v1038, 0
    %v1044 = vunpack.c.l.b16 %v740
    %v1045 = vunpack.c.l.b16 %v741
    %v1046 = vunpack.c.l.b16 %v742
    %v1047 = vunpack.c.l.b16 %v743
    %v1048 = vpack.c.b16 %v1045, %v1044
    %v1049 = vpack.c.b16 %v1047, %v1046
    %v1053 = vsel %vm125, %v1037, 0
    %1055 = vmatpush.bf16.msra.mxu0 0
    %1056 = vmatpush.bf16.msra.mxu0 0
    %1057 = vmatpush.bf16.msra.mxu0 0
    %1058 = vmatpush.bf16.msra.mxu0 0
    %1059 = vmatpush.bf16.msra.mxu0 0
    %1060 = vmatpush.bf16.msra.mxu0 0
    %1061 = vmatpush.bf16.msra.mxu0 %v1049
    %1062 = vmatpush.bf16.msra.mxu0 %v1048
    %1063 = vmatmul.bf16.gmra.mxu0 %v1053
    %v1064 = vpop.f32.mrf.mxu0
    %v1065 = vadd.f32 %v1039, %v1064
    %v1066 = vpop.f32.mrf.mxu0
    %v1067 = vadd.f32 %v1039, %v1066
    %1068 = vdwg.mxu0
    %v1069 = vadd.f32 %v732, %v1065
    %v1070 = vadd.f32 %v733, %v1067
    %v1071 = vld [vmem:[%s759 + $0x2] sm:$0x1]
    %v1072 = vld [vmem:[%s759 + $0x3] sm:$0x1]
    %v1073 = vsel %vm125, %v1069, 0.0
    %1074 = vadd.xlane.f32.xlu0 %v1073
    %v1075 = vpop.xlane.xlu0 %1074
    %v1076 = vsel %vm125, %v1070, 0.0
    %1077 = vadd.xlane.f32.xlu0 %v1076
    %v1078 = vpop.xlane.xlu0 %1077
    %v1079 = vmul.f32 %v1075, %v138
    %v1080 = vmul.f32 %v1078, %v138
    %v1081 = vsub.f32 %v1069, %v1079
    %v1082 = vsub.f32 %v1070, %v1080
    %v1083 = vmul.f32 %v1081, %v1081
    %v1084 = vmul.f32 %v1082, %v1082
    %v1085 = vsel %vm125, %v1083, 0.0
    %1086 = vadd.xlane.f32.xlu0 %v1085
    %v1087 = vpop.xlane.xlu0 %1086
    %v1088 = vsel %vm125, %v1084, 0.0
    %1089 = vadd.xlane.f32.xlu0 %v1088
    %v1090 = vpop.xlane.xlu0 %1089
    %v1091 = vmul.f32 %v1087, %v138
    %v1092 = vmul.f32 %v1090, %v138
    %v1093 = vadd.f32 %v1091, 1e-12
    %v1094 = vadd.f32 %v1092, 1e-12
    %v1095 = vrsqrt.pop %v1093
    %v1096 = vmul.f32 %v1095, %v1093
    %v1097 = vmul.f32 %v1096, %v1095
    %v1098 = vmul.f32 0.5, %v1097
    %v1099 = vsub.f32 1.5, %v1098
    %v1100 = vmul.f32 %v1095, %v1099
    %vm1101 = vweird.f32 %v1093
    %vm1102 = vweird.f32 %v1095
    %vm1103 = vmor %vm1101, %vm1102
    %v1104 = vsel %vm1103, %v1095, %v1100
    %v1105 = vrsqrt.pop %v1094
    %v1106 = vmul.f32 %v1105, %v1094
    %v1107 = vmul.f32 %v1106, %v1105
    %v1108 = vmul.f32 0.5, %v1107
    %v1109 = vsub.f32 1.5, %v1108
    %v1110 = vmul.f32 %v1105, %v1109
    %vm1111 = vweird.f32 %v1094
    %vm1112 = vweird.f32 %v1105
    %vm1113 = vmor %vm1111, %vm1112
    %v1114 = vsel %vm1113, %v1105, %v1110
    %v1115 = vmul.f32 %v1081, %v1104
    %v1116 = vmul.f32 %v1082, %v1114
    %v1117 = vperm.slane %v1071, 0
    %v1118 = vmul.f32 %v1115, %v1117
    %v1119 = vmul.f32 %v1116, %v1117
    %v1120 = vperm.slane %v1072, 0
    %v1121 = vadd.f32 %v1118, %v1120
    %v1122 = vadd.f32 %v1119, %v1120
    %v1123 = vpack.c.bf16 %v1122, %v1121
    %v1124 = vld [vmem:[%s759 + $0x4] sm:$0x1]
    %v1125 = vperm.slane %v1124, 0
    %v1130 = vunpack.c.l.b16 %v745
    %v1131 = vunpack.c.l.b16 %v746
    %v1132 = vunpack.c.l.b16 %v747
    %v1133 = vunpack.c.l.b16 %v748
    %v1134 = vpack.c.b16 %v1131, %v1130
    %v1135 = vpack.c.b16 %v1133, %v1132
    %v1139 = vsel %vm125, %v1123, 0
    %1141 = vmatpush.bf16.msra.mxu0 0
    %1142 = vmatpush.bf16.msra.mxu0 0
    %1143 = vmatpush.bf16.msra.mxu0 0
    %1144 = vmatpush.bf16.msra.mxu0 0
    %1145 = vmatpush.bf16.msra.mxu0 0
    %1146 = vmatpush.bf16.msra.mxu0 0
    %1147 = vmatpush.bf16.msra.mxu0 %v1135
    %1148 = vmatpush.bf16.msra.mxu0 %v1134
    %1149 = vmatmul.bf16.gmra.mxu0 %v1139
    %v1150 = vpop.f32.mrf.mxu0
    %v1151 = vadd.f32 %v1125, %v1150
    %v1152 = vpop.f32.mrf.mxu0
    %v1153 = vadd.f32 %v1125, %v1152
    %1154 = vdwg.mxu0
    %v1155 = vmul.f32 %v1151, %v1151
    %v1156 = vmul.f32 %v1153, %v1153
    %v1157 = vmul.f32 %v1151, %v1155
    %v1158 = vmul.f32 %v1153, %v1156
    %v1159 = vmul.f32 %v1157, 0.044715
    %v1160 = vmul.f32 %v1158, 0.044715
    %v1161 = vadd.f32 %v1151, %v1159
    %v1162 = vadd.f32 %v1153, %v1160
    %v1163 = vmul.f32 %v1161, 0.7978846
    %v1164 = vmul.f32 %v1162, 0.7978846
    %v1165 = vtanh.pop %v1163
    %v1166 = vtanh.pop %v1164
    %v1167 = vadd.f32 %v1165, 1.0
    %v1168 = vadd.f32 %v1166, 1.0
    %v1169 = vmul.f32 %v1167, 0.5
    %v1170 = vmul.f32 %v1168, 0.5
    %v1171 = vmul.f32 %v1151, %v1169
    %v1172 = vmul.f32 %v1153, %v1170
    %v1173 = vpack.c.bf16 %v1172, %v1171
    %v1174 = vld [vmem:[%s759 + $0x5] sm:$0x1]
    %v1175 = vperm.slane %v1174, 0
    %v1184 = vunpack.c.l.b16 %v750
    %v1185 = vunpack.c.l.b16 %v751
    %v1186 = vunpack.c.l.b16 %v752
    %v1187 = vunpack.c.l.b16 %v753
    %v1188 = vunpack.c.l.b16 %v754
    %v1189 = vunpack.c.l.b16 %v755
    %v1190 = vunpack.c.l.b16 %v756
    %v1191 = vunpack.c.l.b16 %v757
    %v1192 = vpack.c.b16 %v1185, %v1184
    %v1193 = vpack.c.b16 %v1187, %v1186
    %v1194 = vpack.c.b16 %v1189, %v1188
    %v1195 = vpack.c.b16 %v1191, %v1190
    %v1201 = vsel %vm662, %v1173, 0
    %1203 = vmatpush.bf16.msra.mxu0 0
    %1204 = vmatpush.bf16.msra.mxu0 0
    %1205 = vmatpush.bf16.msra.mxu0 0
    %1206 = vmatpush.bf16.msra.mxu0 0
    %1207 = vmatpush.bf16.msra.mxu0 %v1195
    %1208 = vmatpush.bf16.msra.mxu0 %v1194
    %1209 = vmatpush.bf16.msra.mxu0 %v1193
    %1210 = vmatpush.bf16.msra.mxu0 %v1192
    %1211 = vmatmul.bf16.gmra.mxu0 %v1201
    %v1212 = vpop.f32.mrf.mxu0
    %v1213 = vadd.f32 %v1175, %v1212
    %v1214 = vpop.f32.mrf.mxu0
    %v1215 = vadd.f32 %v1175, %v1214
    %1216 = vdwg.mxu0
    %v1217 = vadd.f32 %v1121, %v1213
    %v1218 = vadd.f32 %v1122, %v1215
    %v1219 = vld [vmem:[%s759 + $0x6] sm:$0x1]
    %v1220 = vld [vmem:[%s759 + $0x7] sm:$0x1]
    %v1221 = vsel %vm125, %v1217, 0.0
    %1222 = vadd.xlane.f32.xlu0 %v1221
    %v1223 = vpop.xlane.xlu0 %1222
    %v1224 = vsel %vm125, %v1218, 0.0
    %1225 = vadd.xlane.f32.xlu0 %v1224
    %v1226 = vpop.xlane.xlu0 %1225
    %v1227 = vmul.f32 %v1223, %v138
    %v1228 = vmul.f32 %v1226, %v138
    %v1229 = vsub.f32 %v1217, %v1227
    %v1230 = vsub.f32 %v1218, %v1228
    %v1231 = vmul.f32 %v1229, %v1229
    %v1232 = vmul.f32 %v1230, %v1230
    %v1233 = vsel %vm125, %v1231, 0.0
    %1234 = vadd.xlane.f32.xlu0 %v1233
    %v1235 = vpop.xlane.xlu0 %1234
    %v1236 = vsel %vm125, %v1232, 0.0
    %1237 = vadd.xlane.f32.xlu0 %v1236
    %v1238 = vpop.xlane.xlu0 %1237
    %v1239 = vmul.f32 %v1235, %v138
    %v1240 = vmul.f32 %v1238, %v138
    %v1241 = vadd.f32 %v1239, 1e-12
    %v1242 = vadd.f32 %v1240, 1e-12
    %v1243 = vrsqrt.pop %v1241
    %v1244 = vmul.f32 %v1243, %v1241
    %v1245 = vmul.f32 %v1244, %v1243
    %v1246 = vmul.f32 0.5, %v1245
    %v1247 = vsub.f32 1.5, %v1246
    %v1248 = vmul.f32 %v1243, %v1247
    %vm1249 = vweird.f32 %v1241
    %vm1250 = vweird.f32 %v1243
    %vm1251 = vmor %vm1249, %vm1250
    %v1252 = vsel %vm1251, %v1243, %v1248
    %v1253 = vrsqrt.pop %v1242
    %v1254 = vmul.f32 %v1253, %v1242
    %v1255 = vmul.f32 %v1254, %v1253
    %v1256 = vmul.f32 0.5, %v1255
    %v1257 = vsub.f32 1.5, %v1256
    %v1258 = vmul.f32 %v1253, %v1257
    %vm1259 = vweird.f32 %v1242
    %vm1260 = vweird.f32 %v1253
    %vm1261 = vmor %vm1259, %vm1260
    %v1262 = vsel %vm1261, %v1253, %v1258
    %v1263 = vmul.f32 %v1229, %v1252
    %v1264 = vmul.f32 %v1230, %v1262
    %v1265 = vperm.slane %v1219, 0
    %v1266 = vmul.f32 %v1263, %v1265
    %v1267 = vmul.f32 %v1264, %v1265
    %v1268 = vperm.slane %v1220, 0
    %v1269 = vadd.f32 %v1266, %v1268
    %v1270 = vadd.f32 %v1267, %v1268
    %v1271 = vsel %vm125, %v1269, 0.0
    %v1272 = vrot.slane %v1271, 4
    %v1273 = vadd.f32 %v1271, %v1272
    %v1274 = vrot.slane %v1273, 2
    %v1275 = vadd.f32 %v1273, %v1274
    %v1276 = vrot.slane %v1275, 1
    %v1277 = vadd.f32 %v1275, %v1276
    %v1278 = vsel %vm125, %v1270, 0.0
    %v1279 = vrot.slane %v1278, 4
    %v1280 = vadd.f32 %v1278, %v1279
    %v1281 = vrot.slane %v1280, 2
    %v1282 = vadd.f32 %v1280, %v1281
    %v1283 = vrot.slane %v1282, 1
    %v1284 = vadd.f32 %v1282, %v1283
    %v1285 = vrcp.pop 8.0
    %v1286 = vmul.f32 8.0, %v1285
    %v1287 = vsub.f32 1.0, %v1286
    %v1288 = vmul.f32 %v1285, %v1287
    %v1289 = vadd.f32 %v1285, %v1288
    %vm1290 = vweird.f32 %v1285
    %v1291 = vsel %vm1290, %v1285, %v1289
    %v1292 = vmul.f32 %v1277, %v1291
    %v1293 = vmul.f32 %v1284, %v1291
    %v1294 = vld [vmem:[#allocation2 + $0x13] sm:$0x3]
    %v1295 = vld [vmem:[#allocation2 + $0x12] sm:$0x1]
    %v1296 = vperm.slane %v1295, 0
    %vm1299 = vcmask 1041409
    %v1300 = vsel %vm1299, %v1293, %v1292
    %v1301 = vsel %vm125, %v1300, 0
    %v1304 = vsel %vm125, %v1294, 0
    %1306 = vmatpush.xpose.msra.mxu0 0.0
    %1307 = vmatpush.xpose.msra.mxu0 0.0
    %1308 = vmatpush.xpose.msra.mxu0 0.0
    %1309 = vmatpush.xpose.msra.mxu0 0.0
    %1310 = vmatpush.xpose.msra.mxu0 0.0
    %1311 = vmatpush.xpose.msra.mxu0 0.0
    %1312 = vmatpush.xpose.msra.mxu0 0.0
    %1313 = vmatpush.xpose.msra.mxu0 0.0
    %1314 = vmatpush.xpose.msra.mxu0 0.0
    %1315 = vmatpush.xpose.msra.mxu0 0.0
    %1316 = vmatpush.xpose.msra.mxu0 0.0
    %1317 = vmatpush.xpose.msra.mxu0 0.0
    %1318 = vmatpush.xpose.msra.mxu0 0.0
    %1319 = vmatpush.xpose.msra.mxu0 0.0
    %1320 = vmatpush.xpose.msra.mxu0 0.0
    %1321 = vmatpush.xpose.msra.mxu0 %v1304
    %1322 = vmatmul.f32.gmra.mxu0 %v1301
    %v1323 = vpop.f32.mrf.mxu0
    %v1324 = vadd.f32 %v1296, %v1323
    %1325 = vdwg.mxu0
    %vm1326 = vcmask 9216
    %1327 = vst.msk [vmem:[#allocation7] sm:$0x3] %vm1326, %v1324
    // Predicated region
    $region30: #{model_forward.1} parent=1 // pred_check
      _
    $region31: #{model_forward.1} parent=1 // pred_check_branch
      %1329 = sbr.rel (0) target = $region33
    $region32: #{model_forward.1} parent=1 // pred_region
      %1331 = vsyncadd [#allocation4], 0
      %s1333 = sshll.u32 [#allocation7], 4
      %s1334 = int_to_ptr.vmem [resolvable:$true] %s1333
      %s1335 = sshll.u32 %s5, 4
      %s1336 = int_to_ptr.hbm [resolvable:$true] %s1335
      %1338 = dma.vmem_to_hbm [thread:$0]  %s1334, 32, %s1336, [#allocation4]
    $region33: #{model_forward.1} parent=1 // pred_fallthru
      _
    // Predicated region
    $region34: #{model_forward.1} parent=1 // pred_check
      _
    $region35: #{model_forward.1} parent=1 // pred_check_branch
      %1340 = sbr.rel (0) target = $region37
    $region36: #{model_forward.1} parent=1 // pred_region
      %1342 = dma.done [#allocation4], 32
    $region37: #{model_forward.1} parent=1 // pred_fallthru
      _
    %1343 = vsyncpa [#allocation3], 1
    %1344 = vsyncpa [#allocation6], 1
    %1345 = vsyncpa [#allocation4], 1

</llo_original>
